<compile_context>
chip_gen: v5e
topology: v5e:2x2
jax: 0.10.0
libtpu: 0.0.40
codegen_flags: <defaults>
</compile_context>

<pallas_src>
import jax
import jax.numpy as jnp
from jax.experimental import pallas as pl
from jax.experimental.pallas import tpu as pltpu

_LANE = 128


def _round_up(n, m):
    return ((n + m - 1) // m) * m


def _pad_last(a, target):
    pad = target - a.shape[-1]
    if pad == 0:
        return a
    return jnp.pad(a, [(0, 0)] * (a.ndim - 1) + [(0, pad)])


def _pick_chunks(TH, W):
    """Number of token sub-tiles so fc2 (MXU) of chunk j overlaps conv/GELU (VPU) of j+1."""
    for nc in (4, 3, 2):
        if TH % nc == 0 and (TH // nc) * W >= 128:
            return nc
    return 1


def _choose_tile_rows(H, W, Cin, HID, Cout, budget_bytes, min_row_blocks=1):
    """Largest divisor of H whose per-step VMEM working set fits the budget."""
    wbytes = 2 * 2 * (Cin * HID + HID * Cout)   # bf16 weights, double-buffered
    wbytes += 2 * 4 * (11 * HID + Cout)         # f32 taps/biases, double-buffered

    def est(th):
        ntok = th * W
        halo = (th + 2) * W
        b = 2 * ntok * Cin * 2               # interior x block (bf16, double-buffered)
        b += 2 * 2 * W * Cin * 2             # top/bottom halo row blocks (bf16)
        b += 2 * ntok * Cout * 4             # output block (f32, double-buffered)
        b += halo * HID * 2                  # bf16 fc1 scratch
        b += halo * (HID * 4 + Cin * 2)      # fc1 f32 matmul result + concat temporary
        b += 4 * ntok * HID * 4              # conv/GELU f32 temporaries (unchunked bound)
        return b + wbytes

    divisors = [d for d in range(1, H + 1) if H % d == 0]
    # Megacore (v7x): keep >= min_row_blocks grid steps so both TensorCores have work.
    preferred = [d for d in divisors if H // d >= min_row_blocks]
    if preferred:
        divisors = preferred
    fitting = [d for d in divisors if est(d) <= budget_bytes]
    return max(fitting) if fitting else min(divisors)


def _make_kernel(TH, W, HID, NC):
    NTOK = TH * W
    CH = NTOK // NC
    INV_SQRT2 = 0.7071067811865476

    def kernel(x_ref, xt_ref, xb_ref, w1_ref, b1_ref, cw_ref, cb_ref,
               w2_ref, b2_ref, o_ref, h1_ref):
        r = pl.program_id(1)
        last_r = pl.num_programs(1) - 1

        # ---- fc1: one (NTOK + 2W, Cin) x (Cin, HID) matmul covering the halo rows ----
        xa = jnp.concatenate([xt_ref[...], x_ref[...], xb_ref[...]], axis=0)  # bf16
        h1 = jnp.dot(xa, w1_ref[...], preferred_element_type=jnp.float32) + b1_ref[...]
        h1_ref[...] = h1.astype(jnp.bfloat16)

        # Out-of-image halo rows must be zero (Conv2d zero padding): edge steps only.
        @pl.when(r == 0)
        def _():
            h1_ref[pl.ds(0, W), :] = jnp.zeros((W, HID), jnp.bfloat16)

        @pl.when(r == last_r)
        def _():
            h1_ref[pl.ds((TH + 1) * W, W), :] = jnp.zeros((W, HID), jnp.bfloat16)

        cw = cw_ref[...]          # (9, HID) taps, t = (dh+1)*3 + (dw+1)
        cb = cb_ref[...]          # (1, HID)
        w2 = w2_ref[...]          # (HID, Cout) bf16
        b2 = b2_ref[...]          # (1, Cout)

        # Column masks: dw = -1 / +1 neighbours do not exist at image cols 0 / W-1.
        # (Chunk boundaries are row-aligned, so one mask pair serves every chunk.)
        col = jax.lax.broadcasted_iota(jnp.int32, (CH, 1), 0) % W
        mask_l = col > 0
        mask_r = col < (W - 1)

        # ---- depthwise 3x3 conv + GELU + fc2, chunked over the token tile ----
        for c in range(NC):
            cs = c * CH
            acc_l = jnp.zeros((CH, HID), jnp.float32)
            acc_c = jnp.zeros((CH, HID), jnp.float32)
            acc_r = jnp.zeros((CH, HID), jnp.float32)
            for dh in (-1, 0, 1):
                # Sublane-aligned load (start is a multiple of W); the +-1 column taps
                # are XLU rolls, and their wrap positions are killed by mask_l/mask_r.
                row = h1_ref[pl.ds((1 + dh) * W + cs, CH), :].astype(jnp.float32)
                t = (dh + 1) * 3
                acc_l = acc_l + pltpu.roll(row, 1, 0) * cw[t + 0:t + 1, :]       # dw = -1
                acc_c = acc_c + row * cw[t + 1:t + 2, :]                         # dw =  0
                acc_r = acc_r + pltpu.roll(row, CH - 1, 0) * cw[t + 2:t + 3, :]  # dw = +1
            conv = (acc_c + jnp.where(mask_l, acc_l, 0.0)
                    + jnp.where(mask_r, acc_r, 0.0) + cb)

            # Exact (erf) GELU, matching F.gelu default; dropout p=0.0 -> identity.
            g = 0.5 * conv * (1.0 + jax.lax.erf(conv * INV_SQRT2))

            out = jnp.dot(g.astype(jnp.bfloat16), w2,
                          preferred_element_type=jnp.float32) + b2
            o_ref[pl.ds(cs, CH), :] = out.astype(o_ref.dtype)

    return kernel


def mix_feedforward_pallas(x, params, h, w, *, tile_rows=None):
    """x: (B, H*W, Cin).  params: (w1, b1, cw, cb, w2, b2) in f32."""
    w1, b1, cw, cb, w2, b2 = params
    B, HW, Cin = x.shape
    HID = w1.shape[1]
    Cout = w2.shape[1]
    assert HW == h * w
    assert w % 8 == 0, "image width must be a multiple of 8 (sublane alignment)"

    Cin_p = _round_up(Cin, _LANE)
    HID_p = _round_up(HID, _LANE)
    Cout_p = _round_up(Cout, _LANE)

    # Channel zero-padding is mathematically inert; bf16 activations/weights halve DMA,
    # all matmul accumulation stays in f32 inside the kernel.
    xp = _pad_last(x, Cin_p).astype(jnp.bfloat16)
    w1p = _pad_last(jnp.pad(w1, ((0, Cin_p - Cin), (0, 0))), HID_p).astype(jnp.bfloat16)
    b1p = _pad_last(b1, HID_p)
    cwp = _pad_last(cw, HID_p)
    cbp = _pad_last(cb, HID_p)
    w2p = _pad_last(jnp.pad(w2, ((0, HID_p - HID), (0, 0))), Cout_p).astype(jnp.bfloat16)
    b2p = _pad_last(b2, Cout_p)

    try:
        vmem_cap = int(pltpu.get_tpu_info().vmem_capacity_bytes)
    except Exception:
        vmem_cap = 64 * 1024 * 1024           # conservative default (v7x per-core)

    if tile_rows is None:
        tile_rows = _choose_tile_rows(
            h, w, Cin_p, HID_p, Cout_p,
            budget_bytes=int(vmem_cap * 0.5),
            min_row_blocks=2 if B < 2 else 1)
    assert h % tile_rows == 0, "tile_rows must divide the image height"
    TH = int(tile_rows)
    R = h // TH
    NTOK = TH * w
    NC = _pick_chunks(TH, w)

    kernel = _make_kernel(TH, w, HID_p, NC)

    def row_main(b, r):
        return (b, r, 0)

    def row_top(b, r):
        return (b, jnp.maximum(r * TH - 1, 0), 0)      # clamped; zeroed when r == 0

    def row_bot(b, r):
        return (b, jnp.minimum(r * TH + TH, h - 1), 0)  # clamped; zeroed when r == R-1

    const = lambda b, r: (0, 0)

    grid_spec = pltpu.PrefetchScalarGridSpec(
        num_scalar_prefetch=0,
        grid=(B, R),
        in_specs=[
            pl.BlockSpec((None, NTOK, Cin_p), row_main),   # x interior rows
            pl.BlockSpec((None, w, Cin_p), row_top),       # x top halo row
            pl.BlockSpec((None, w, Cin_p), row_bot),       # x bottom halo row
            pl.BlockSpec((Cin_p, HID_p), const),           # w1 (bf16)
            pl.BlockSpec((1, HID_p), const),               # b1
            pl.BlockSpec((9, HID_p), const),               # depthwise taps
            pl.BlockSpec((1, HID_p), const),               # conv bias
            pl.BlockSpec((HID_p, Cout_p), const),          # w2 (bf16)
            pl.BlockSpec((1, Cout_p), const),              # b2
        ],
        out_specs=pl.BlockSpec((None, NTOK, Cout_p), row_main),
        scratch_shapes=[
            pltpu.VMEM(((TH + 2) * w, HID_p), jnp.bfloat16),   # fc1 map incl. halo rows
        ],
    )

    out_p = pl.pallas_call(
        kernel,
        out_shape=jax.ShapeDtypeStruct((B, HW, Cout_p), x.dtype),
        grid_spec=grid_spec,
        compiler_params=pltpu.CompilerParams(
            dimension_semantics=("parallel", "parallel"),
            vmem_limit_bytes=int(vmem_cap * 0.75),
        ),
    )(xp, xp, xp, w1p, b1p, cwp, cbp, w2p, b2p)

    # TODO(synk): consumers that accept a lane-padded (Cout_p) buffer can skip this
    # slice and avoid an extra HBM round trip on the output.
    return out_p[:, :, :Cout]


def ref_forward(x, params, h, w):
    """Pure-JAX f32 reference mirroring the PyTorch NCHW semantics."""
    w1, b1, cw, cb, w2, b2 = params
    B, HW, Cin = x.shape
    HID = w1.shape[1]
    y = x @ w1 + b1                                               # (B, HW, HID)
    ymap = y.reshape(B, h, w, HID).transpose(0, 3, 1, 2)          # NCHW
    k = cw.T.reshape(HID, 3, 3)[:, None, :, :]                    # (HID,1,3,3) OIHW
    conv = jax.lax.conv_general_dilated(
        ymap, k, window_strides=(1, 1), padding=((1, 1), (1, 1)),
        feature_group_count=HID)
    conv = conv + cb.reshape(1, HID, 1, 1)
    z = conv.transpose(0, 2, 3, 1).reshape(B, HW, HID)
    g = 0.5 * z * (1.0 + jax.lax.erf(z * (2.0 ** -0.5)))
    return g @ w2 + b2


if __name__ == "__main__":
    B, h, w = 2, 16, 16
    in_features, hidden_features, out_features = 8, 32, 8
    HW = h * w

    key = jax.random.PRNGKey(0)
    kx, k1, k2, k3, k4, k5, k6 = jax.random.split(key, 7)

    x = jax.random.normal(kx, (B, HW, in_features), jnp.float32)

    # Deterministic parameters (w1/w2 stored pre-transposed vs PyTorch's (out, in)).
    w1 = jax.random.normal(k1, (in_features, hidden_features), jnp.float32) * 0.1
    b1 = jax.random.normal(k2, (1, hidden_features), jnp.float32) * 0.1
    cw = jax.random.normal(k3, (9, hidden_features), jnp.float32) * 0.1   # tap (dh+1)*3+(dw+1)
    cb = jax.random.normal(k4, (1, hidden_features), jnp.float32) * 0.1
    w2 = jax.random.normal(k5, (hidden_features, out_features), jnp.float32) * 0.1
    b2 = jax.random.normal(k6, (1, out_features), jnp.float32) * 0.1
    params = (w1, b1, cw, cb, w2, b2)

    ref = jax.block_until_ready(ref_forward(x, params, h, w))

    # Explicit 2-row-block tiling (exercises the halo path) + auto VMEM-derived tiling.
    out_tiled = jax.block_until_ready(
        mix_feedforward_pallas(x, params, h, w, tile_rows=8))
    out_auto = jax.block_until_ready(mix_feedforward_pallas(x, params, h, w))

    assert out_tiled.shape == (B, HW, out_features)
    assert out_auto.shape == (B, HW, out_features)
    # bf16 MXU operands / bf16 fc1 scratch with f32 accumulation -> loose-ish tolerance.
    assert jnp.allclose(out_tiled, ref, atol=2e-2, rtol=2e-2), "tiled mismatch vs reference"
    assert jnp.allclose(out_auto, ref, atol=2e-2, rtol=2e-2), "auto-tile mismatch vs reference"

    print("KERNEL_OK")
</pallas_src>

<mosaic_0001>
module attributes {stable_mosaic.version = 11 : i64} {
  func.func @kernel(%arg0: i32, %arg1: i32, %arg2: memref<1x128x128xbf16, #tpu.memory_space<vmem>>, %arg3: memref<1x16x128xbf16, #tpu.memory_space<vmem>>, %arg4: memref<1x16x128xbf16, #tpu.memory_space<vmem>>, %arg5: memref<128x128xbf16, #tpu.memory_space<vmem>>, %arg6: memref<1x128xf32, #tpu.memory_space<vmem>>, %arg7: memref<9x128xf32, #tpu.memory_space<vmem>>, %arg8: memref<1x128xf32, #tpu.memory_space<vmem>>, %arg9: memref<128x128xbf16, #tpu.memory_space<vmem>>, %arg10: memref<1x128xf32, #tpu.memory_space<vmem>>, %arg11: memref<1x128x128xf32, #tpu.memory_space<vmem>>, %arg12: memref<160x128xbf16, #tpu.memory_space<vmem>>) attributes {dimension_semantics = [#tpu.dimension_semantics<parallel>, #tpu.dimension_semantics<parallel>], iteration_bounds = array<i64: 2, 2>, scalar_prefetch = 0 : i64, scratch_operands = 1 : i64, tpu.core_type = #tpu.core_type<tc>, window_params = [{transform_indices = @transform_0, window_bounds = array<i64: 1, 128, 128>}, {transform_indices = @transform_1, window_bounds = array<i64: 1, 16, 128>}, {transform_indices = @transform_2, window_bounds = array<i64: 1, 16, 128>}, {pipeline_mode = #tpu.pipeline_mode<synchronous>, transform_indices = @transform_3, window_bounds = array<i64: 128, 128>}, {pipeline_mode = #tpu.pipeline_mode<synchronous>, transform_indices = @transform_4, window_bounds = array<i64: 1, 128>}, {pipeline_mode = #tpu.pipeline_mode<synchronous>, transform_indices = @transform_5, window_bounds = array<i64: 9, 128>}, {pipeline_mode = #tpu.pipeline_mode<synchronous>, transform_indices = @transform_6, window_bounds = array<i64: 1, 128>}, {pipeline_mode = #tpu.pipeline_mode<synchronous>, transform_indices = @transform_7, window_bounds = array<i64: 128, 128>}, {pipeline_mode = #tpu.pipeline_mode<synchronous>, transform_indices = @transform_8, window_bounds = array<i64: 1, 128>}, {transform_indices = @transform_9, window_bounds = array<i64: 1, 128, 128>}]} {
    %c0 = arith.constant 0 : index
    %c0_0 = arith.constant 0 : index
    %c0_1 = arith.constant 0 : index
    %0 = vector.load %arg3[%c0, %c0_0, %c0_1] : memref<1x16x128xbf16, #tpu.memory_space<vmem>>, vector<1x16x128xbf16>
    %1 = vector.shape_cast %0 : vector<1x16x128xbf16> to vector<16x128xbf16>
    %c0_2 = arith.constant 0 : index
    %c0_3 = arith.constant 0 : index
    %c0_4 = arith.constant 0 : index
    %2 = vector.load %arg2[%c0_2, %c0_3, %c0_4] : memref<1x128x128xbf16, #tpu.memory_space<vmem>>, vector<1x128x128xbf16>
    %3 = vector.shape_cast %2 : vector<1x128x128xbf16> to vector<128x128xbf16>
    %c0_5 = arith.constant 0 : index
    %c0_6 = arith.constant 0 : index
    %c0_7 = arith.constant 0 : index
    %4 = vector.load %arg4[%c0_5, %c0_6, %c0_7] : memref<1x16x128xbf16, #tpu.memory_space<vmem>>, vector<1x16x128xbf16>
    %5 = vector.shape_cast %4 : vector<1x16x128xbf16> to vector<16x128xbf16>
    %6 = tpu.concatenate %1, %3, %5 in 0 : vector<16x128xbf16>, vector<128x128xbf16>, vector<16x128xbf16> -> vector<160x128xbf16>
    %c0_8 = arith.constant 0 : index
    %c0_9 = arith.constant 0 : index
    %7 = vector.load %arg5[%c0_8, %c0_9] : memref<128x128xbf16, #tpu.memory_space<vmem>>, vector<128x128xbf16>
    %cst = arith.constant dense<0.000000e+00> : vector<160x128xf32>
    %8 = tpu.matmul %6, %7, %cst {dimension_numbers = #tpu.dot_dimension_numbers<[1], [0], [0], [1], [0, 0, 1, 1], [], []>} : vector<160x128xbf16>, vector<128x128xbf16>, vector<160x128xf32> -> vector<160x128xf32>
    %c0_10 = arith.constant 0 : index
    %c0_11 = arith.constant 0 : index
    %9 = vector.load %arg6[%c0_10, %c0_11] : memref<1x128xf32, #tpu.memory_space<vmem>>, vector<1x128xf32>
    %10 = vector.broadcast %9 : vector<1x128xf32> to vector<160x128xf32>
    %11 = arith.addf %8, %10 : vector<160x128xf32>
    %12 = arith.truncf %11 : vector<160x128xf32> to vector<160x128xbf16>
    %c0_12 = arith.constant 0 : index
    %c0_13 = arith.constant 0 : index
    %13 = vector.load %arg12[%c0_12, %c0_13] : memref<160x128xbf16, #tpu.memory_space<vmem>>, vector<160x128xbf16>
    tpu.vector_store %arg12[%c0_12, %c0_13], %12 {strides = array<i32>} : memref<160x128xbf16, #tpu.memory_space<vmem>>, vector<160x128xbf16>,
    %c0_i32 = arith.constant 0 : i32
    %14 = arith.cmpi eq, %arg1, %c0_i32 : i32
    %15 = arith.extui %14 : i1 to i32
    %c0_i32_14 = arith.constant 0 : i32
    %16 = arith.cmpi ne, %15, %c0_i32_14 : i32
    scf.if %16 {
      %cst_51 = arith.constant 0.000000e+00 : bf16
      %123 = vector.broadcast %cst_51 : bf16 to vector<16x128xbf16>
      %c0_52 = arith.constant 0 : index
      %c0_53 = arith.constant 0 : index
      %124 = vector.load %arg12[%c0_52, %c0_53] : memref<160x128xbf16, #tpu.memory_space<vmem>>, vector<16x128xbf16>
      tpu.vector_store %arg12[%c0_52, %c0_53], %123 {strides = array<i32>} : memref<160x128xbf16, #tpu.memory_space<vmem>>, vector<16x128xbf16>,
    } else {
    }
    %c1_i32 = arith.constant 1 : i32
    %17 = arith.cmpi eq, %arg1, %c1_i32 : i32
    %18 = arith.extui %17 : i1 to i32
    %c0_i32_15 = arith.constant 0 : i32
    %19 = arith.cmpi ne, %18, %c0_i32_15 : i32
    scf.if %19 {
      %cst_51 = arith.constant 0.000000e+00 : bf16
      %123 = vector.broadcast %cst_51 : bf16 to vector<16x128xbf16>
      %c144 = arith.constant 144 : index
      %c0_52 = arith.constant 0 : index
      %124 = vector.load %arg12[%c144, %c0_52] : memref<160x128xbf16, #tpu.memory_space<vmem>>, vector<16x128xbf16>
      tpu.vector_store %arg12[%c144, %c0_52], %123 {strides = array<i32>} : memref<160x128xbf16, #tpu.memory_space<vmem>>, vector<16x128xbf16>,
    } else {
    }
    %c0_16 = arith.constant 0 : index
    %c0_17 = arith.constant 0 : index
    %20 = vector.load %arg7[%c0_16, %c0_17] : memref<9x128xf32, #tpu.memory_space<vmem>>, vector<9x128xf32>
    %c0_18 = arith.constant 0 : index
    %c0_19 = arith.constant 0 : index
    %21 = vector.load %arg8[%c0_18, %c0_19] : memref<1x128xf32, #tpu.memory_space<vmem>>, vector<1x128xf32>
    %c0_20 = arith.constant 0 : index
    %c0_21 = arith.constant 0 : index
    %22 = vector.load %arg9[%c0_20, %c0_21] : memref<128x128xbf16, #tpu.memory_space<vmem>>, vector<128x128xbf16>
    %c0_22 = arith.constant 0 : index
    %c0_23 = arith.constant 0 : index
    %23 = vector.load %arg10[%c0_22, %c0_23] : memref<1x128xf32, #tpu.memory_space<vmem>>, vector<1x128xf32>
    %24 = tpu.iota {dimensions = array<i32: 0>} : vector<128x1xi32>
    %c16_i32 = arith.constant 16 : i32
    %c0_i32_24 = arith.constant 0 : i32
    %25 = arith.cmpi eq, %c16_i32, %c0_i32_24 : i32
    %c1_i32_25 = arith.constant 1 : i32
    %26 = arith.select %25, %c1_i32_25, %c16_i32 : i32
    %27 = vector.broadcast %26 : i32 to vector<128x1xi32>
    %28 = arith.remsi %24, %27 : vector<128x1xi32>
    %c0_i32_26 = arith.constant 0 : i32
    %29 = vector.broadcast %c0_i32_26 : i32 to vector<128x1xi32>
    %30 = arith.cmpi ne, %28, %29 : vector<128x1xi32>
    %c0_i32_27 = arith.constant 0 : i32
    %31 = vector.broadcast %c0_i32_27 : i32 to vector<128x1xi32>
    %32 = arith.cmpi slt, %28, %31 : vector<128x1xi32>
    %c0_i32_28 = arith.constant 0 : i32
    %33 = arith.cmpi slt, %26, %c0_i32_28 : i32
    %34 = vector.broadcast %33 : i1 to vector<128x1xi1>
    %35 = vector.broadcast %34 : vector<128x1xi1> to vector<128x1xi1>
    %36 = arith.xori %32, %35 : vector<128x1xi1>
    %37 = arith.andi %36, %30 : vector<128x1xi1>
    %38 = vector.broadcast %26 : i32 to vector<128x1xi32>
    %39 = arith.addi %28, %38 : vector<128x1xi32>
    %40 = arith.select %37, %39, %28 : vector<128x1xi1>, vector<128x1xi32>
    %c0_i32_29 = arith.constant 0 : i32
    %41 = vector.broadcast %c0_i32_29 : i32 to vector<128x1xi32>
    %42 = arith.cmpi sgt, %40, %41 : vector<128x1xi32>
    %c15_i32 = arith.constant 15 : i32
    %43 = vector.broadcast %c15_i32 : i32 to vector<128x1xi32>
    %44 = arith.cmpi slt, %40, %43 : vector<128x1xi32>
    %cst_30 = arith.constant 0.000000e+00 : f32
    %45 = vector.broadcast %cst_30 : f32 to vector<128x128xf32>
    %cst_31 = arith.constant 0.000000e+00 : f32
    %46 = vector.broadcast %cst_31 : f32 to vector<128x128xf32>
    %cst_32 = arith.constant 0.000000e+00 : f32
    %47 = vector.broadcast %cst_32 : f32 to vector<128x128xf32>
    %c0_33 = arith.constant 0 : index
    %c0_34 = arith.constant 0 : index
    %48 = vector.load %arg12[%c0_33, %c0_34] : memref<160x128xbf16, #tpu.memory_space<vmem>>, vector<128x128xbf16>
    %49 = arith.extf %48 : vector<128x128xbf16> to vector<128x128xf32>
    %c1_i32_35 = arith.constant 1 : i32
    %50 = tpu.dynamic_rotate %49 by %c1_i32_35 dim 0 : vector<128x128xf32>, i32 -> vector<128x128xf32>
    %51 = vector.extract_strided_slice %20 {offsets = [0, 0], sizes = [1, 128], strides = [1, 1]} : vector<9x128xf32> to vector<1x128xf32>
    %52 = vector.broadcast %51 : vector<1x128xf32> to vector<128x128xf32>
    %53 = arith.mulf %50, %52 : vector<128x128xf32>
    %54 = arith.addf %45, %53 : vector<128x128xf32>
    %55 = vector.extract_strided_slice %20 {offsets = [1, 0], sizes = [1, 128], strides = [1, 1]} : vector<9x128xf32> to vector<1x128xf32>
    %56 = vector.broadcast %55 : vector<1x128xf32> to vector<128x128xf32>
    %57 = arith.mulf %49, %56 : vector<128x128xf32>
    %58 = arith.addf %46, %57 : vector<128x128xf32>
    %c127_i32 = arith.constant 127 : i32
    %59 = tpu.dynamic_rotate %49 by %c127_i32 dim 0 : vector<128x128xf32>, i32 -> vector<128x128xf32>
    %60 = vector.extract_strided_slice %20 {offsets = [2, 0], sizes = [1, 128], strides = [1, 1]} : vector<9x128xf32> to vector<1x128xf32>
    %61 = vector.broadcast %60 : vector<1x128xf32> to vector<128x128xf32>
    %62 = arith.mulf %59, %61 : vector<128x128xf32>
    %63 = arith.addf %47, %62 : vector<128x128xf32>
    %c16 = arith.constant 16 : index
    %c0_36 = arith.constant 0 : index
    %64 = vector.load %arg12[%c16, %c0_36] : memref<160x128xbf16, #tpu.memory_space<vmem>>, vector<128x128xbf16>
    %65 = arith.extf %64 : vector<128x128xbf16> to vector<128x128xf32>
    %c1_i32_37 = arith.constant 1 : i32
    %66 = tpu.dynamic_rotate %65 by %c1_i32_37 dim 0 : vector<128x128xf32>, i32 -> vector<128x128xf32>
    %67 = vector.extract_strided_slice %20 {offsets = [3, 0], sizes = [1, 128], strides = [1, 1]} : vector<9x128xf32> to vector<1x128xf32>
    %68 = vector.broadcast %67 : vector<1x128xf32> to vector<128x128xf32>
    %69 = arith.mulf %66, %68 : vector<128x128xf32>
    %70 = arith.addf %54, %69 : vector<128x128xf32>
    %71 = vector.extract_strided_slice %20 {offsets = [4, 0], sizes = [1, 128], strides = [1, 1]} : vector<9x128xf32> to vector<1x128xf32>
    %72 = vector.broadcast %71 : vector<1x128xf32> to vector<128x128xf32>
    %73 = arith.mulf %65, %72 : vector<128x128xf32>
    %74 = arith.addf %58, %73 : vector<128x128xf32>
    %c127_i32_38 = arith.constant 127 : i32
    %75 = tpu.dynamic_rotate %65 by %c127_i32_38 dim 0 : vector<128x128xf32>, i32 -> vector<128x128xf32>
    %76 = vector.extract_strided_slice %20 {offsets = [5, 0], sizes = [1, 128], strides = [1, 1]} : vector<9x128xf32> to vector<1x128xf32>
    %77 = vector.broadcast %76 : vector<1x128xf32> to vector<128x128xf32>
    %78 = arith.mulf %75, %77 : vector<128x128xf32>
    %79 = arith.addf %63, %78 : vector<128x128xf32>
    %c32 = arith.constant 32 : index
    %c0_39 = arith.constant 0 : index
    %80 = vector.load %arg12[%c32, %c0_39] : memref<160x128xbf16, #tpu.memory_space<vmem>>, vector<128x128xbf16>
    %81 = arith.extf %80 : vector<128x128xbf16> to vector<128x128xf32>
    %c1_i32_40 = arith.constant 1 : i32
    %82 = tpu.dynamic_rotate %81 by %c1_i32_40 dim 0 : vector<128x128xf32>, i32 -> vector<128x128xf32>
    %83 = vector.extract_strided_slice %20 {offsets = [6, 0], sizes = [1, 128], strides = [1, 1]} : vector<9x128xf32> to vector<1x128xf32>
    %84 = vector.broadcast %83 : vector<1x128xf32> to vector<128x128xf32>
    %85 = arith.mulf %82, %84 : vector<128x128xf32>
    %86 = arith.addf %70, %85 : vector<128x128xf32>
    %87 = vector.extract_strided_slice %20 {offsets = [7, 0], sizes = [1, 128], strides = [1, 1]} : vector<9x128xf32> to vector<1x128xf32>
    %88 = vector.broadcast %87 : vector<1x128xf32> to vector<128x128xf32>
    %89 = arith.mulf %81, %88 : vector<128x128xf32>
    %90 = arith.addf %74, %89 : vector<128x128xf32>
    %c127_i32_41 = arith.constant 127 : i32
    %91 = tpu.dynamic_rotate %81 by %c127_i32_41 dim 0 : vector<128x128xf32>, i32 -> vector<128x128xf32>
    %92 = vector.extract_strided_slice %20 {offsets = [8, 0], sizes = [1, 128], strides = [1, 1]} : vector<9x128xf32> to vector<1x128xf32>
    %93 = vector.broadcast %92 : vector<1x128xf32> to vector<128x128xf32>
    %94 = arith.mulf %91, %93 : vector<128x128xf32>
    %95 = arith.addf %79, %94 : vector<128x128xf32>
    %cst_42 = arith.constant 0.000000e+00 : f32
    %96 = vector.shape_cast %42 : vector<128x1xi1> to vector<128x1xi1>
    %97 = vector.broadcast %96 : vector<128x1xi1> to vector<128x128xi1>
    %98 = vector.broadcast %cst_42 : f32 to vector<128x128xf32>
    %99 = arith.select %97, %86, %98 : vector<128x128xi1>, vector<128x128xf32>
    %100 = arith.addf %90, %99 : vector<128x128xf32>
    %cst_43 = arith.constant 0.000000e+00 : f32
    %101 = vector.shape_cast %44 : vector<128x1xi1> to vector<128x1xi1>
    %102 = vector.broadcast %101 : vector<128x1xi1> to vector<128x128xi1>
    %103 = vector.broadcast %cst_43 : f32 to vector<128x128xf32>
    %104 = arith.select %102, %95, %103 : vector<128x128xi1>, vector<128x128xf32>
    %105 = arith.addf %100, %104 : vector<128x128xf32>
    %106 = vector.broadcast %21 : vector<1x128xf32> to vector<128x128xf32>
    %107 = arith.addf %105, %106 : vector<128x128xf32>
    %cst_44 = arith.constant 5.000000e-01 : f32
    %108 = vector.broadcast %cst_44 : f32 to vector<128x128xf32>
    %109 = arith.mulf %108, %107 : vector<128x128xf32>
    %cst_45 = arith.constant 0.707106769 : f32
    %110 = vector.broadcast %cst_45 : f32 to vector<128x128xf32>
    %111 = arith.mulf %107, %110 : vector<128x128xf32>
    %112 = math.erf %111 : vector<128x128xf32>
    %cst_46 = arith.constant 1.000000e+00 : f32
    %113 = vector.broadcast %cst_46 : f32 to vector<128x128xf32>
    %114 = arith.addf %113, %112 : vector<128x128xf32>
    %115 = arith.mulf %109, %114 : vector<128x128xf32>
    %116 = arith.truncf %115 : vector<128x128xf32> to vector<128x128xbf16>
    %cst_47 = arith.constant dense<0.000000e+00> : vector<128x128xf32>
    %117 = tpu.matmul %116, %22, %cst_47 {dimension_numbers = #tpu.dot_dimension_numbers<[1], [0], [0], [1], [0, 0, 1, 1], [], []>} : vector<128x128xbf16>, vector<128x128xbf16>, vector<128x128xf32> -> vector<128x128xf32>
    %118 = vector.broadcast %23 : vector<1x128xf32> to vector<128x128xf32>
    %119 = arith.addf %117, %118 : vector<128x128xf32>
    %c0_48 = arith.constant 0 : index
    %c0_49 = arith.constant 0 : index
    %c0_50 = arith.constant 0 : index
    %120 = vector.load %arg11[%c0_48, %c0_49, %c0_50] : memref<1x128x128xf32, #tpu.memory_space<vmem>>, vector<1x128x128xf32>
    %121 = vector.shape_cast %120 : vector<1x128x128xf32> to vector<128x128xf32>
    %122 = vector.shape_cast %119 : vector<128x128xf32> to vector<1x128x128xf32>
    tpu.vector_store %arg11[%c0_48, %c0_49, %c0_50], %122 {strides = array<i32>} : memref<1x128x128xf32, #tpu.memory_space<vmem>>, vector<1x128x128xf32>,
    return
  }
  func.func @transform_0(%arg0: i32, %arg1: i32) -> (i32, i32, i32) {
    %c0_i32 = arith.constant 0 : i32
    %c0_i32_0 = arith.constant 0 : i32
    return %arg0, %arg1, %c0_i32 : i32, i32, i32
  }
  func.func @transform_1(%arg0: i32, %arg1: i32) -> (i32, i32, i32) {
    %c8_i32 = arith.constant 8 : i32
    %0 = arith.muli %arg1, %c8_i32 : i32
    %c1_i32 = arith.constant 1 : i32
    %1 = arith.subi %0, %c1_i32 : i32
    %c0_i32 = arith.constant 0 : i32
    %2 = arith.maxsi %1, %c0_i32 : i32
    %c0_i32_0 = arith.constant 0 : i32
    %c0_i32_1 = arith.constant 0 : i32
    return %arg0, %2, %c0_i32_0 : i32, i32, i32
  }
  func.func @transform_2(%arg0: i32, %arg1: i32) -> (i32, i32, i32) {
    %c8_i32 = arith.constant 8 : i32
    %0 = arith.muli %arg1, %c8_i32 : i32
    %c8_i32_0 = arith.constant 8 : i32
    %1 = arith.addi %0, %c8_i32_0 : i32
    %c15_i32 = arith.constant 15 : i32
    %2 = arith.minsi %1, %c15_i32 : i32
    %c0_i32 = arith.constant 0 : i32
    %c0_i32_1 = arith.constant 0 : i32
    return %arg0, %2, %c0_i32 : i32, i32, i32
  }
  func.func @transform_3(%arg0: i32, %arg1: i32) -> (i32, i32) {
    %c0_i32 = arith.constant 0 : i32
    %c0_i32_0 = arith.constant 0 : i32
    %c0_i32_1 = arith.constant 0 : i32
    return %c0_i32, %c0_i32_0 : i32, i32
  }
  func.func @transform_4(%arg0: i32, %arg1: i32) -> (i32, i32) {
    %c0_i32 = arith.constant 0 : i32
    %c0_i32_0 = arith.constant 0 : i32
    %c0_i32_1 = arith.constant 0 : i32
    return %c0_i32, %c0_i32_0 : i32, i32
  }
  func.func @transform_5(%arg0: i32, %arg1: i32) -> (i32, i32) {
    %c0_i32 = arith.constant 0 : i32
    %c0_i32_0 = arith.constant 0 : i32
    %c0_i32_1 = arith.constant 0 : i32
    return %c0_i32, %c0_i32_0 : i32, i32
  }
  func.func @transform_6(%arg0: i32, %arg1: i32) -> (i32, i32) {
    %c0_i32 = arith.constant 0 : i32
    %c0_i32_0 = arith.constant 0 : i32
    %c0_i32_1 = arith.constant 0 : i32
    return %c0_i32, %c0_i32_0 : i32, i32
  }
  func.func @transform_7(%arg0: i32, %arg1: i32) -> (i32, i32) {
    %c0_i32 = arith.constant 0 : i32
    %c0_i32_0 = arith.constant 0 : i32
    %c0_i32_1 = arith.constant 0 : i32
    return %c0_i32, %c0_i32_0 : i32, i32
  }
  func.func @transform_8(%arg0: i32, %arg1: i32) -> (i32, i32) {
    %c0_i32 = arith.constant 0 : i32
    %c0_i32_0 = arith.constant 0 : i32
    %c0_i32_1 = arith.constant 0 : i32
    return %c0_i32, %c0_i32_0 : i32, i32
  }
  func.func @transform_9(%arg0: i32, %arg1: i32) -> (i32, i32, i32) {
    %c0_i32 = arith.constant 0 : i32
    %c0_i32_0 = arith.constant 0 : i32
    return %arg0, %arg1, %c0_i32 : i32, i32, i32
  }
}

</mosaic_0001>

<llo_original>
// kernel: tpu_custom_call.1
$region0: #{tpu_custom_call.1}
  #allocation0 [shape = 'u32[]', space=smem, size = 0x4, offset = 0x4, fixed_abs, tag = 'smem constant byte address 0x4 - core index']
  #allocation1 [shape = 'u32[72,128]{1,0:T(1,128)}', space=vmem, size = 0x9000, scoped, tag = 'internal scratch']
  #allocation2 [shape = 'bf16[160,128]{1,0:T(8,128)(2,1)}', space=vmem, size = 0xa000, scoped, tag = 'scratch operand']
  %s0 = inlined_call_operand.hbm [shape: bf16[2,256,128], index: 0, kind: input, shape index: {}]
  %s1 = inlined_call_operand.hbm [shape: bf16[2,256,128], index: 1, kind: input, shape index: {}]
  %s2 = inlined_call_operand.hbm [shape: bf16[2,256,128], index: 2, kind: input, shape index: {}]
  %s3 = inlined_call_operand.hbm [shape: bf16[128,128], index: 3, kind: input, shape index: {}]
  %s4 = inlined_call_operand.vmem [shape: f32[1,128], index: 4, kind: input, shape index: {}]
  %s5 = inlined_call_operand.hbm [shape: f32[9,128], index: 5, kind: input, shape index: {}]
  %s6 = inlined_call_operand.vmem [shape: f32[1,128], index: 6, kind: input, shape index: {}]
  %s7 = inlined_call_operand.hbm [shape: bf16[128,128], index: 7, kind: input, shape index: {}]
  %s8 = inlined_call_operand.vmem [shape: f32[1,128], index: 8, kind: input, shape index: {}]
  %s9 = inlined_call_operand.hbm [shape: f32[2,256,128], index: 9, kind: output, shape index: {}]
  %s10 = sld [smem:[#allocation0]]
  $region101: #{tpu_custom_call.1} parent=0
    _
  %s12 = ssub.s32 1, %s10
  %s13 = scalar_select 0, %s12, %s10
  $region1: #{tpu_custom_call.1} parent=0
    #allocation3 [shape = 'u8[65536]{0}', space=vmem, size = 0x10000, scoped, tag = 'input window, operand 0']
    #allocation4 [shape = 's32[2]{0}', space=sflag, size = 0x8, scoped, tag = 'scoped memory for tpu_custom_call.1']
    #allocation5 [shape = 's32[2]{0}', space=sflag, size = 0x8, scoped, tag = 'scoped memory for tpu_custom_call.1']
    #allocation6 [shape = 'u8[8192]{0}', space=vmem, size = 0x2000, scoped, tag = 'input window, operand 1']
    #allocation7 [shape = 's32[2]{0}', space=sflag, size = 0x8, scoped, tag = 'scoped memory for tpu_custom_call.1']
    #allocation8 [shape = 'u8[8192]{0}', space=vmem, size = 0x2000, scoped, tag = 'input window, operand 2']
    #allocation9 [shape = 'u8[32768]{0}', space=vmem, size = 0x8000, scoped, tag = 'input window, operand 3, single buffered']
    #allocation10 [shape = 's32[1]{0}', space=sflag, size = 0x4, scoped, tag = 'scoped memory for tpu_custom_call.1']
    #allocation11 [shape = 'u8[8192]{0}', space=vmem, size = 0x2000, scoped, tag = 'input window, operand 5, single buffered']
    #allocation12 [shape = 'u8[32768]{0}', space=vmem, size = 0x8000, scoped, tag = 'input window, operand 7, single buffered']
    #allocation13 [shape = 's32[1]{0}', space=sflag, size = 0x4, scoped, tag = 'scoped memory for tpu_custom_call.1']
    #allocation14 [shape = 'u8[131072]{0}', space=vmem, size = 0x20000, scoped, tag = 'output window, operand 0']
    %14 = vsyncpa [#allocation4], 0
    %s15 = scalar_lea.sflag [#allocation4], 1
    %16 = vsyncpa %s15, 0
    %17 = vsyncpa [#allocation7], 0
    %s18 = scalar_lea.sflag [#allocation7], 1
    %19 = vsyncpa %s18, 0
    %20 = vsyncpa [#allocation10], 0
    %21 = vsyncpa [#allocation13], 0
    %22 = vsyncpa [#allocation5], 0
    %s23 = scalar_lea.sflag [#allocation5], 1
    %24 = vsyncpa %s23, 0
    loop: start=0, step=1, limit=6
    $region2: #{tpu_custom_call.1} parent=1 // loop_pre_header
      _
    $region3: #{tpu_custom_call.1} parent=1 // loop_header
      %s26 = sphi 0, %s30
      %p27 = scmp.ge.s32.totalorder %s26, 6
      %s33 = sphi 0, %s45
      %s34 = sphi 0, %s41
      %s35 = sphi 0, %s33
      %s36 = sphi 0, %s34
      %s37 = sphi 0, %s35
      %s38 = sphi 0, %s36
      %s50 = sphi 0, %s52
      %s53 = sphi 0, %s50
      %s54 = sphi 0, %s53
      %s70 = sphi 0, %s54
      %s86 = sphi 0, %s88
      %s89 = sphi 0, %s86
      %s90 = sphi 0, %s89
      %s106 = sphi 0, %s90
      %s122 = sphi 0, %s124
      %s125 = sphi 0, %s122
      %s126 = sphi 0, %s125
      %s142 = sphi 0, %s126
      %s146 = sphi 0, %s146
      %s148 = sphi 0, %s146
      %s149 = sphi 0, %s148
      %s163 = sphi 0, %s149
      %s167 = sphi 0, %s167
      %s169 = sphi 0, %s167
      %s170 = sphi 0, %s169
      %s184 = sphi 0, %s170
      %s188 = sphi 0, %s188
      %s190 = sphi 0, %s188
      %s191 = sphi 0, %s190
      %s205 = sphi 0, %s191
      %s209 = sphi 0, %s209
      %s211 = sphi 0, %s209
      %s212 = sphi 0, %s211
      %s226 = sphi 0, %s212
      %s230 = sphi 0, %s230
      %s232 = sphi 0, %s230
      %s233 = sphi 0, %s232
      %s247 = sphi 0, %s233
      %s251 = sphi 0, %s251
      %s253 = sphi 0, %s251
      %s254 = sphi 0, %s253
      %s268 = sphi 0, %s254
      %s276 = sphi 0, %s278
      %s279 = sphi 0, %s276
      %s280 = sphi 0, %s279
      %s296 = sphi 0, %s280
    $region4: #{tpu_custom_call.1} parent=1 // loop_header_branch
      %29 = sbr.rel (%p27) target = $region8
    $region5: #{tpu_custom_call.1} parent=1 // loop_body
      %s31 = ssub.s32 %s26, 1
      %s32 = ssub.s32 %s26, 2
      %s39 = sadd.s32 1, %s34
      %p40 = scmp.ge.s32.totalorder %s39, 2
      %s41 = scalar_select %p40, 0, %s39
      %s42 = sadd.s32 1, %s33
      %s43 = scalar_select %p40, %s42, %s33
      %p44 = scmp.ge.s32.totalorder %s43, 2
      %s45 = scalar_select %p44, 0, %s43
      %s46 = ssub.s32 %s33, %s45
      %s47 = ssub.s32 %s34, %s41
      %s48 = sor.u32 %s46, %s47
      %p49 = scmp.eq.s32.totalorder %s48, 0
      %s51 = sadd.s32 %s50, 1
      %s52 = scalar_select %p49, %s50, %s51
      %p55 = pneg %p49
      %p56 = scmp.eq.s32.totalorder %s26, 3
      %p57 = por %p55, %p56
      %p58 = scmp.ne.s32.totalorder %s50, %s53
      %p59 = scmp.eq.s32.totalorder %s26, 0
      %p60 = por %p58, %p59
      %p61 = scmp.ne.s32.totalorder %s50, %s53
      %p62 = scmp.eq.s32.totalorder %s31, 3
      %p63 = por %p61, %p62
      %p64 = scmp.ne.s32.totalorder %s53, %s54
      %p65 = scmp.eq.s32.totalorder %s31, 0
      %p66 = por %p64, %p65
      %p67 = scmp.ne.s32.totalorder %s53, %s54
      %p68 = scmp.eq.s32.totalorder %s32, 3
      %p69 = por %p67, %p68
      %p71 = scmp.ne.s32.totalorder %s54, %s70
      %p72 = scmp.eq.s32.totalorder %s32, 0
      %p73 = por %p71, %p72
      %s74 = smul.u32 %s34, 8
      %s75 = ssub.s32 %s74, 1
      %p76 = scmp.gt.s32.totalorder %s75, 0
      %s77 = scalar_select %p76, %s75, 0
      %s78 = smul.u32 %s41, 8
      %s79 = ssub.s32 %s78, 1
      %p80 = scmp.gt.s32.totalorder %s79, 0
      %s81 = scalar_select %p80, %s79, 0
      %s82 = ssub.s32 %s33, %s45
      %s83 = ssub.s32 %s77, %s81
      %s84 = sor.u32 %s82, %s83
      %p85 = scmp.eq.s32.totalorder %s84, 0
      %s87 = sadd.s32 %s86, 1
      %s88 = scalar_select %p85, %s86, %s87
      %p91 = pneg %p85
      %p92 = scmp.eq.s32.totalorder %s26, 3
      %p93 = por %p91, %p92
      %p94 = scmp.ne.s32.totalorder %s86, %s89
      %p95 = scmp.eq.s32.totalorder %s26, 0
      %p96 = por %p94, %p95
      %p97 = scmp.ne.s32.totalorder %s86, %s89
      %p98 = scmp.eq.s32.totalorder %s31, 3
      %p99 = por %p97, %p98
      %p100 = scmp.ne.s32.totalorder %s89, %s90
      %p101 = scmp.eq.s32.totalorder %s31, 0
      %p102 = por %p100, %p101
      %p103 = scmp.ne.s32.totalorder %s89, %s90
      %p104 = scmp.eq.s32.totalorder %s32, 3
      %p105 = por %p103, %p104
      %p107 = scmp.ne.s32.totalorder %s90, %s106
      %p108 = scmp.eq.s32.totalorder %s32, 0
      %p109 = por %p107, %p108
      %s110 = smul.u32 %s34, 8
      %s111 = sadd.s32 %s110, 8
      %p112 = scmp.lt.s32.totalorder %s111, 15
      %s113 = scalar_select %p112, %s111, 15
      %s114 = smul.u32 %s41, 8
      %s115 = sadd.s32 %s114, 8
      %p116 = scmp.lt.s32.totalorder %s115, 15
      %s117 = scalar_select %p116, %s115, 15
      %s118 = ssub.s32 %s33, %s45
      %s119 = ssub.s32 %s113, %s117
      %s120 = sor.u32 %s118, %s119
      %p121 = scmp.eq.s32.totalorder %s120, 0
      %s123 = sadd.s32 %s122, 1
      %s124 = scalar_select %p121, %s122, %s123
      %p127 = pneg %p121
      %p128 = scmp.eq.s32.totalorder %s26, 3
      %p129 = por %p127, %p128
      %p130 = scmp.ne.s32.totalorder %s122, %s125
      %p131 = scmp.eq.s32.totalorder %s26, 0
      %p132 = por %p130, %p131
      %p133 = scmp.ne.s32.totalorder %s122, %s125
      %p134 = scmp.eq.s32.totalorder %s31, 3
      %p135 = por %p133, %p134
      %p136 = scmp.ne.s32.totalorder %s125, %s126
      %p137 = scmp.eq.s32.totalorder %s31, 0
      %p138 = por %p136, %p137
      %p139 = scmp.ne.s32.totalorder %s125, %s126
      %p140 = scmp.eq.s32.totalorder %s32, 3
      %p141 = por %p139, %p140
      %p143 = scmp.ne.s32.totalorder %s126, %s142
      %p144 = scmp.eq.s32.totalorder %s32, 0
      %p145 = por %p143, %p144
      %s147 = sadd.s32 %s146, 1
      %p150 = scmp.eq.s32.totalorder %s26, 3
      %p151 = scmp.ne.s32.totalorder %s146, %s148
      %p152 = scmp.eq.s32.totalorder %s26, 0
      %p153 = por %p151, %p152
      %p154 = scmp.ne.s32.totalorder %s146, %s148
      %p155 = scmp.eq.s32.totalorder %s31, 3
      %p156 = por %p154, %p155
      %p157 = scmp.ne.s32.totalorder %s148, %s149
      %p158 = scmp.eq.s32.totalorder %s31, 0
      %p159 = por %p157, %p158
      %p160 = scmp.ne.s32.totalorder %s148, %s149
      %p161 = scmp.eq.s32.totalorder %s32, 3
      %p162 = por %p160, %p161
      %p164 = scmp.ne.s32.totalorder %s149, %s163
      %p165 = scmp.eq.s32.totalorder %s32, 0
      %p166 = por %p164, %p165
      %s168 = sadd.s32 %s167, 1
      %p171 = scmp.eq.s32.totalorder %s26, 3
      %p172 = scmp.ne.s32.totalorder %s167, %s169
      %p173 = scmp.eq.s32.totalorder %s26, 0
      %p174 = por %p172, %p173
      %p175 = scmp.ne.s32.totalorder %s167, %s169
      %p176 = scmp.eq.s32.totalorder %s31, 3
      %p177 = por %p175, %p176
      %p178 = scmp.ne.s32.totalorder %s169, %s170
      %p179 = scmp.eq.s32.totalorder %s31, 0
      %p180 = por %p178, %p179
      %p181 = scmp.ne.s32.totalorder %s169, %s170
      %p182 = scmp.eq.s32.totalorder %s32, 3
      %p183 = por %p181, %p182
      %p185 = scmp.ne.s32.totalorder %s170, %s184
      %p186 = scmp.eq.s32.totalorder %s32, 0
      %p187 = por %p185, %p186
      %s189 = sadd.s32 %s188, 1
      %p192 = scmp.eq.s32.totalorder %s26, 3
      %p193 = scmp.ne.s32.totalorder %s188, %s190
      %p194 = scmp.eq.s32.totalorder %s26, 0
      %p195 = por %p193, %p194
      %p196 = scmp.ne.s32.totalorder %s188, %s190
      %p197 = scmp.eq.s32.totalorder %s31, 3
      %p198 = por %p196, %p197
      %p199 = scmp.ne.s32.totalorder %s190, %s191
      %p200 = scmp.eq.s32.totalorder %s31, 0
      %p201 = por %p199, %p200
      %p202 = scmp.ne.s32.totalorder %s190, %s191
      %p203 = scmp.eq.s32.totalorder %s32, 3
      %p204 = por %p202, %p203
      %p206 = scmp.ne.s32.totalorder %s191, %s205
      %p207 = scmp.eq.s32.totalorder %s32, 0
      %p208 = por %p206, %p207
      %s210 = sadd.s32 %s209, 1
      %p213 = scmp.eq.s32.totalorder %s26, 3
      %p214 = scmp.ne.s32.totalorder %s209, %s211
      %p215 = scmp.eq.s32.totalorder %s26, 0
      %p216 = por %p214, %p215
      %p217 = scmp.ne.s32.totalorder %s209, %s211
      %p218 = scmp.eq.s32.totalorder %s31, 3
      %p219 = por %p217, %p218
      %p220 = scmp.ne.s32.totalorder %s211, %s212
      %p221 = scmp.eq.s32.totalorder %s31, 0
      %p222 = por %p220, %p221
      %p223 = scmp.ne.s32.totalorder %s211, %s212
      %p224 = scmp.eq.s32.totalorder %s32, 3
      %p225 = por %p223, %p224
      %p227 = scmp.ne.s32.totalorder %s212, %s226
      %p228 = scmp.eq.s32.totalorder %s32, 0
      %p229 = por %p227, %p228
      %s231 = sadd.s32 %s230, 1
      %p234 = scmp.eq.s32.totalorder %s26, 3
      %p235 = scmp.ne.s32.totalorder %s230, %s232
      %p236 = scmp.eq.s32.totalorder %s26, 0
      %p237 = por %p235, %p236
      %p238 = scmp.ne.s32.totalorder %s230, %s232
      %p239 = scmp.eq.s32.totalorder %s31, 3
      %p240 = por %p238, %p239
      %p241 = scmp.ne.s32.totalorder %s232, %s233
      %p242 = scmp.eq.s32.totalorder %s31, 0
      %p243 = por %p241, %p242
      %p244 = scmp.ne.s32.totalorder %s232, %s233
      %p245 = scmp.eq.s32.totalorder %s32, 3
      %p246 = por %p244, %p245
      %p248 = scmp.ne.s32.totalorder %s233, %s247
      %p249 = scmp.eq.s32.totalorder %s32, 0
      %p250 = por %p248, %p249
      %s252 = sadd.s32 %s251, 1
      %p255 = scmp.eq.s32.totalorder %s26, 3
      %p256 = scmp.ne.s32.totalorder %s251, %s253
      %p257 = scmp.eq.s32.totalorder %s26, 0
      %p258 = por %p256, %p257
      %p259 = scmp.ne.s32.totalorder %s251, %s253
      %p260 = scmp.eq.s32.totalorder %s31, 3
      %p261 = por %p259, %p260
      %p262 = scmp.ne.s32.totalorder %s253, %s254
      %p263 = scmp.eq.s32.totalorder %s31, 0
      %p264 = por %p262, %p263
      %p265 = scmp.ne.s32.totalorder %s253, %s254
      %p266 = scmp.eq.s32.totalorder %s32, 3
      %p267 = por %p265, %p266
      %p269 = scmp.ne.s32.totalorder %s254, %s268
      %p270 = scmp.eq.s32.totalorder %s32, 0
      %p271 = por %p269, %p270
      %s272 = ssub.s32 %s33, %s45
      %s273 = ssub.s32 %s34, %s41
      %s274 = sor.u32 %s272, %s273
      %p275 = scmp.eq.s32.totalorder %s274, 0
      %s277 = sadd.s32 %s276, 1
      %s278 = scalar_select %p275, %s276, %s277
      %p281 = pneg %p275
      %p282 = scmp.eq.s32.totalorder %s26, 3
      %p283 = por %p281, %p282
      %p284 = scmp.ne.s32.totalorder %s276, %s279
      %p285 = scmp.eq.s32.totalorder %s26, 0
      %p286 = por %p284, %p285
      %p287 = scmp.ne.s32.totalorder %s276, %s279
      %p288 = scmp.eq.s32.totalorder %s31, 3
      %p289 = por %p287, %p288
      %p290 = scmp.ne.s32.totalorder %s279, %s280
      %p291 = scmp.eq.s32.totalorder %s31, 0
      %p292 = por %p290, %p291
      %p293 = scmp.ne.s32.totalorder %s279, %s280
      %p294 = scmp.eq.s32.totalorder %s32, 3
      %p295 = por %p293, %p294
      %p297 = scmp.ne.s32.totalorder %s280, %s296
      %p298 = scmp.eq.s32.totalorder %s32, 0
      %p299 = por %p297, %p298
      %p300 = scmp.le.s32.totalorder 1, %s26
      %p301 = scmp.lt.s32.totalorder %s26, 5
      %p302 = pnand %p300, %p301
      %p303 = pneg %p302
      // Predicated region
      $region9: #{tpu_custom_call.1} parent=5 // pred_check
        _
      $region10: #{tpu_custom_call.1} parent=5 // pred_check_branch
        %305 = sbr.rel (%p302) target = $region12
      $region11: #{tpu_custom_call.1} parent=5 // pred_region
        %s306 = ssub.s32 %s26, 1
        // Predicated region
        $region13: #{tpu_custom_call.1} parent=11 // pred_check
          %p307 = pneg %p159
        $region14: #{tpu_custom_call.1} parent=11 // pred_check_branch
          %309 = sbr.rel (%p307) target = $region16
        $region15: #{tpu_custom_call.1} parent=11 // pred_region
          %311 = vsyncadd [#allocation10], 0
          %s312 = sshll.u32 %s3, 4
          %s313 = int_to_ptr.hbm [resolvable:$true] %s312
          %s314 = sshll.u32 [#allocation9], 4
          %s315 = int_to_ptr.vmem [resolvable:$true] %s314
          %320 = dma.hbm_to_vmem [thread:$0]  %s313, 1024, %s315, [#allocation10], 64, 64, 4
        $region16: #{tpu_custom_call.1} parent=11 // pred_fallthru
          _
        // Predicated region
        $region17: #{tpu_custom_call.1} parent=11 // pred_check
          %p321 = pneg %p180
        $region18: #{tpu_custom_call.1} parent=11 // pred_check_branch
          %323 = sbr.rel (%p321) target = $region20
        $region19: #{tpu_custom_call.1} parent=11 // pred_region
          _
        $region20: #{tpu_custom_call.1} parent=11 // pred_fallthru
          _
        // Predicated region
        $region21: #{tpu_custom_call.1} parent=11 // pred_check
          %p324 = pneg %p201
        $region22: #{tpu_custom_call.1} parent=11 // pred_check_branch
          %326 = sbr.rel (%p324) target = $region24
        $region23: #{tpu_custom_call.1} parent=11 // pred_region
          %328 = vsyncadd [#allocation10], 0
          %s329 = sshll.u32 %s5, 4
          %s330 = int_to_ptr.hbm [resolvable:$true] %s329
          %s331 = sshll.u32 [#allocation11], 4
          %s332 = int_to_ptr.vmem [resolvable:$true] %s331
          %337 = dma.hbm_to_vmem [thread:$0]  %s330, 256, %s332, [#allocation10], 128, 128, 8
        $region24: #{tpu_custom_call.1} parent=11 // pred_fallthru
          _
        // Predicated region
        $region25: #{tpu_custom_call.1} parent=11 // pred_check
          %p338 = pneg %p222
        $region26: #{tpu_custom_call.1} parent=11 // pred_check_branch
          %340 = sbr.rel (%p338) target = $region28
        $region27: #{tpu_custom_call.1} parent=11 // pred_region
          _
        $region28: #{tpu_custom_call.1} parent=11 // pred_fallthru
          _
        // Predicated region
        $region29: #{tpu_custom_call.1} parent=11 // pred_check
          %p341 = pneg %p243
        $region30: #{tpu_custom_call.1} parent=11 // pred_check_branch
          %343 = sbr.rel (%p341) target = $region32
        $region31: #{tpu_custom_call.1} parent=11 // pred_region
          %345 = vsyncadd [#allocation13], 0
          %s346 = sshll.u32 %s7, 4
          %s347 = int_to_ptr.hbm [resolvable:$true] %s346
          %s348 = sshll.u32 [#allocation12], 4
          %s349 = int_to_ptr.vmem [resolvable:$true] %s348
          %354 = dma.hbm_to_vmem [thread:$0]  %s347, 1024, %s349, [#allocation13], 64, 64, 4
        $region32: #{tpu_custom_call.1} parent=11 // pred_fallthru
          _
        // Predicated region
        $region33: #{tpu_custom_call.1} parent=11 // pred_check
          %p355 = pneg %p264
        $region34: #{tpu_custom_call.1} parent=11 // pred_check_branch
          %357 = sbr.rel (%p355) target = $region36
        $region35: #{tpu_custom_call.1} parent=11 // pred_region
          _
        $region36: #{tpu_custom_call.1} parent=11 // pred_fallthru
          _
      $region12: #{tpu_custom_call.1} parent=5 // pred_fallthru
        _
      %p358 = scmp.lt.s32.totalorder %s26, 4
      // Predicated region
      $region37: #{tpu_custom_call.1} parent=5 // pred_check
        %p359 = pneg %p358
      $region38: #{tpu_custom_call.1} parent=5 // pred_check_branch
        %361 = sbr.rel (%p359) target = $region40
      $region39: #{tpu_custom_call.1} parent=5 // pred_region
        // Predicated region
        $region41: #{tpu_custom_call.1} parent=39 // pred_check
          %p362 = pneg %p60
        $region42: #{tpu_custom_call.1} parent=39 // pred_check_branch
          %364 = sbr.rel (%p362) target = $region44
        $region43: #{tpu_custom_call.1} parent=39 // pred_region
          %s365 = sand.u32 %s50, 1
          %s366 = scalar_lea.sflag [#allocation4], %s365
          %s367 = sand.u32 %s50, 1
          %s368 = smul.addr %s367, 64
          %s369 = scalar_lea.vmem [#allocation3], %s368
          %s370 = smul.u32 16, %s34
          %372 = vsyncadd %s366, 0
          %s373 = smul.addr %s33, 32
          %s374 = sadd.s32 %s370, %s373
          %s375 = smul.addr %s374, 4
          %s376 = scalar_lea.hbm %s0, %s375
          %s377 = sshll.u32 %s376, 4
          %s378 = int_to_ptr.hbm [resolvable:$true] %s377
          %s379 = sshll.u32 %s369, 4
          %s380 = int_to_ptr.vmem [resolvable:$true] %s379
          %385 = dma.hbm_to_vmem [thread:$0]  %s378, 1024, %s380, %s366, 64, 64, 4
        $region44: #{tpu_custom_call.1} parent=39 // pred_fallthru
          _
        // Predicated region
        $region45: #{tpu_custom_call.1} parent=39 // pred_check
          %p386 = pneg %p96
        $region46: #{tpu_custom_call.1} parent=39 // pred_check_branch
          %388 = sbr.rel (%p386) target = $region48
        $region47: #{tpu_custom_call.1} parent=39 // pred_region
          %s389 = sand.u32 %s26, 1
          %s390 = scalar_lea.sflag [#allocation7], %s389
          %s391 = sand.u32 %s86, 1
          %s392 = smul.addr %s391, 8
          %s393 = scalar_lea.vmem [#allocation6], %s392
          %s394 = smul.u32 %s34, 8
          %s395 = ssub.s32 %s394, 1
          %p396 = scmp.gt.s32.totalorder %s395, 0
          %s397 = scalar_select %p396, %s395, 0
          %s398 = smul.u32 2, %s397
          %400 = vsyncadd %s390, 0
          %s401 = smul.addr %s33, 32
          %s402 = sadd.s32 %s398, %s401
          %s403 = smul.addr %s402, 4
          %s404 = scalar_lea.hbm %s1, %s403
          %s405 = sshll.u32 %s404, 4
          %s406 = int_to_ptr.hbm [resolvable:$true] %s405
          %s407 = sshll.u32 %s393, 4
          %s408 = int_to_ptr.vmem [resolvable:$true] %s407
          %413 = dma.hbm_to_vmem [thread:$0]  %s406, 128, %s408, %s390, 64, 64, 4
        $region48: #{tpu_custom_call.1} parent=39 // pred_fallthru
          _
        // Predicated region
        $region49: #{tpu_custom_call.1} parent=39 // pred_check
          %p414 = pneg %p132
        $region50: #{tpu_custom_call.1} parent=39 // pred_check_branch
          %416 = sbr.rel (%p414) target = $region52
        $region51: #{tpu_custom_call.1} parent=39 // pred_region
          %s417 = sand.u32 %s26, 1
          %s418 = scalar_lea.sflag [#allocation7], %s417
          %s419 = sand.u32 %s122, 1
          %s420 = smul.addr %s419, 8
          %s421 = scalar_lea.vmem [#allocation8], %s420
          %s422 = smul.u32 %s34, 8
          %s423 = sadd.s32 %s422, 8
          %p424 = scmp.lt.s32.totalorder %s423, 15
          %s425 = scalar_select %p424, %s423, 15
          %s426 = smul.u32 2, %s425
          %428 = vsyncadd %s418, 0
          %s429 = smul.addr %s33, 32
          %s430 = sadd.s32 %s426, %s429
          %s431 = smul.addr %s430, 4
          %s432 = scalar_lea.hbm %s2, %s431
          %s433 = sshll.u32 %s432, 4
          %s434 = int_to_ptr.hbm [resolvable:$true] %s433
          %s435 = sshll.u32 %s421, 4
          %s436 = int_to_ptr.vmem [resolvable:$true] %s435
          %441 = dma.hbm_to_vmem [thread:$0]  %s434, 128, %s436, %s418, 64, 64, 4
        $region52: #{tpu_custom_call.1} parent=39 // pred_fallthru
          _
      $region40: #{tpu_custom_call.1} parent=5 // pred_fallthru
        _
      %p442 = scmp.le.s32.totalorder 1, %s26
      %p443 = scmp.lt.s32.totalorder %s26, 5
      %p444 = pnand %p442, %p443
      %p445 = pneg %p444
      // Predicated region
      $region53: #{tpu_custom_call.1} parent=5 // pred_check
        _
      $region54: #{tpu_custom_call.1} parent=5 // pred_check_branch
        %447 = sbr.rel (%p444) target = $region56
      $region55: #{tpu_custom_call.1} parent=5 // pred_region
        %s448 = ssub.s32 %s26, 1
        %s449 = sand.u32 %s53, 1
        %s450 = scalar_lea.sflag [#allocation4], %s449
        %s451 = sand.u32 %s53, 1
        %s452 = smul.addr %s451, 64
        %s453 = scalar_lea.vmem [#allocation3], %s452
        // Predicated region
        $region57: #{tpu_custom_call.1} parent=55 // pred_check
          %p454 = pneg %p66
        $region58: #{tpu_custom_call.1} parent=55 // pred_check_branch
          %456 = sbr.rel (%p454) target = $region60
        $region59: #{tpu_custom_call.1} parent=55 // pred_region
          %458 = dma.done %s450, 1024
        $region60: #{tpu_custom_call.1} parent=55 // pred_fallthru
          _
        %s459 = sand.u32 %s31, 1
        %s460 = scalar_lea.sflag [#allocation7], %s459
        %s461 = sand.u32 %s89, 1
        %s462 = smul.addr %s461, 8
        %s463 = scalar_lea.vmem [#allocation6], %s462
        // Predicated region
        $region61: #{tpu_custom_call.1} parent=55 // pred_check
          %p464 = pneg %p102
        $region62: #{tpu_custom_call.1} parent=55 // pred_check_branch
          %466 = sbr.rel (%p464) target = $region64
        $region63: #{tpu_custom_call.1} parent=55 // pred_region
          %468 = dma.done %s460, 128
        $region64: #{tpu_custom_call.1} parent=55 // pred_fallthru
          _
        %s469 = sand.u32 %s31, 1
        %s470 = scalar_lea.sflag [#allocation7], %s469
        %s471 = sand.u32 %s125, 1
        %s472 = smul.addr %s471, 8
        %s473 = scalar_lea.vmem [#allocation8], %s472
        // Predicated region
        $region65: #{tpu_custom_call.1} parent=55 // pred_check
          %p474 = pneg %p138
        $region66: #{tpu_custom_call.1} parent=55 // pred_check_branch
          %476 = sbr.rel (%p474) target = $region68
        $region67: #{tpu_custom_call.1} parent=55 // pred_region
          %478 = dma.done %s470, 128
        $region68: #{tpu_custom_call.1} parent=55 // pred_fallthru
          _
        // Predicated region
        $region69: #{tpu_custom_call.1} parent=55 // pred_check
          %p479 = pneg %p159
        $region70: #{tpu_custom_call.1} parent=55 // pred_check_branch
          %481 = sbr.rel (%p479) target = $region72
        $region71: #{tpu_custom_call.1} parent=55 // pred_region
          %483 = dma.done [#allocation10], 1024
        $region72: #{tpu_custom_call.1} parent=55 // pred_fallthru
          _
        // Predicated region
        $region73: #{tpu_custom_call.1} parent=55 // pred_check
          %p484 = pneg %p201
        $region74: #{tpu_custom_call.1} parent=55 // pred_check_branch
          %486 = sbr.rel (%p484) target = $region76
        $region75: #{tpu_custom_call.1} parent=55 // pred_region
          %488 = dma.done [#allocation10], 256
        $region76: #{tpu_custom_call.1} parent=55 // pred_fallthru
          _
        // Predicated region
        $region77: #{tpu_custom_call.1} parent=55 // pred_check
          %p489 = pneg %p243
        $region78: #{tpu_custom_call.1} parent=55 // pred_check_branch
          %491 = sbr.rel (%p489) target = $region80
        $region79: #{tpu_custom_call.1} parent=55 // pred_region
          %493 = dma.done [#allocation13], 1024
        $region80: #{tpu_custom_call.1} parent=55 // pred_fallthru
          _
        %s494 = sand.u32 %s53, 1
        %s495 = scalar_lea.sflag [#allocation4], %s494
        %s496 = sand.u32 %s53, 1
        %s497 = smul.addr %s496, 64
        %s498 = scalar_lea.vmem [#allocation3], %s497
        %p499 = pneg %p66
        %p500 = pneg %p63
        %s501 = sand.u32 %s31, 1
        %s502 = scalar_lea.sflag [#allocation7], %s501
        %s503 = sand.u32 %s89, 1
        %s504 = smul.addr %s503, 8
        %s505 = scalar_lea.vmem [#allocation6], %s504
        %p506 = pneg %p102
        %p507 = pneg %p99
        %s508 = sand.u32 %s31, 1
        %s509 = scalar_lea.sflag [#allocation7], %s508
        %s510 = sand.u32 %s125, 1
        %s511 = smul.addr %s510, 8
        %s512 = scalar_lea.vmem [#allocation8], %s511
        %p513 = pneg %p138
        %p514 = pneg %p135
        %p515 = pneg %p159
        %p516 = pneg %p156
        %p517 = pneg %p180
        %p518 = pneg %p177
        %p519 = pneg %p201
        %p520 = pneg %p198
        %p521 = pneg %p222
        %p522 = pneg %p219
        %p523 = pneg %p243
        %p524 = pneg %p240
        %p525 = pneg %p264
        %p526 = pneg %p261
        %p527 = pneg %p292
        %p528 = pneg %p289
        %s529 = sand.u32 %s279, 1
        %s530 = scalar_lea.sflag [#allocation5], %s529
        %s531 = sand.u32 %s279, 1
        %s532 = smul.addr %s531, 128
        %s533 = scalar_lea.vmem [#allocation14], %s532
        %s534 = smul.u32 16, %s36
        %s535 = smul.u32 %s36, 8
        %s536 = ssub.s32 %s535, 1
        %p537 = scmp.gt.s32.totalorder %s536, 0
        %s538 = scalar_select %p537, %s536, 0
        %s539 = smul.u32 2, %s538
        %s540 = smul.u32 %s36, 8
        %s541 = sadd.s32 %s540, 8
        %p542 = scmp.lt.s32.totalorder %s541, 15
        %s543 = scalar_select %p542, %s541, 15
        %s544 = smul.u32 2, %s543
        %s545 = smul.u32 16, %s36
        %v547 = vld [vmem:[%s463] sm:$0xf]
        %v548 = vld [vmem:[%s463 + $0x4] sm:$0xf]
        %v549 = vld [vmem:[%s453] sm:$0xf]
        %v550 = vld [vmem:[%s453 + $0x4] sm:$0xf]
        %v551 = vld [vmem:[%s453 + $0x8] sm:$0xf]
        %v552 = vld [vmem:[%s453 + $0xc] sm:$0xf]
        %v553 = vld [vmem:[%s453 + $0x10] sm:$0xf]
        %v554 = vld [vmem:[%s453 + $0x14] sm:$0xf]
        %v555 = vld [vmem:[%s453 + $0x18] sm:$0xf]
        %v556 = vld [vmem:[%s453 + $0x1c] sm:$0xf]
        %v557 = vld [vmem:[%s453 + $0x20] sm:$0xf]
        %v558 = vld [vmem:[%s453 + $0x24] sm:$0xf]
        %v559 = vld [vmem:[%s453 + $0x28] sm:$0xf]
        %v560 = vld [vmem:[%s453 + $0x2c] sm:$0xf]
        %v561 = vld [vmem:[%s453 + $0x30] sm:$0xf]
        %v562 = vld [vmem:[%s453 + $0x34] sm:$0xf]
        %v563 = vld [vmem:[%s453 + $0x38] sm:$0xf]
        %v564 = vld [vmem:[%s453 + $0x3c] sm:$0xf]
        %v565 = vld [vmem:[%s473] sm:$0xf]
        %v566 = vld [vmem:[%s473 + $0x4] sm:$0xf]
        %v569 = vunpack.c.l.b16 %v547
        %v570 = vunpack.c.l.b16 %v548
        %v571 = vpack.c.b16 %v570, %v569
        %v589 = vunpack.c.l.b16 %v549
        %v590 = vunpack.c.l.b16 %v550
        %v591 = vunpack.c.l.b16 %v551
        %v592 = vunpack.c.l.b16 %v552
        %v593 = vunpack.c.l.b16 %v553
        %v594 = vunpack.c.l.b16 %v554
        %v595 = vunpack.c.l.b16 %v555
        %v596 = vunpack.c.l.b16 %v556
        %v597 = vunpack.c.l.b16 %v557
        %v598 = vunpack.c.l.b16 %v558
        %v599 = vunpack.c.l.b16 %v559
        %v600 = vunpack.c.l.b16 %v560
        %v601 = vunpack.c.l.b16 %v561
        %v602 = vunpack.c.l.b16 %v562
        %v603 = vunpack.c.l.b16 %v563
        %v604 = vunpack.c.l.b16 %v564
        %v605 = vpack.c.b16 %v590, %v589
        %v606 = vpack.c.b16 %v592, %v591
        %v607 = vpack.c.b16 %v594, %v593
        %v608 = vpack.c.b16 %v596, %v595
        %v609 = vpack.c.b16 %v598, %v597
        %v610 = vpack.c.b16 %v600, %v599
        %v611 = vpack.c.b16 %v602, %v601
        %v612 = vpack.c.b16 %v604, %v603
        %v623 = vunpack.c.l.b16 %v565
        %v624 = vunpack.c.l.b16 %v566
        %v625 = vpack.c.b16 %v624, %v623
        %v627 = vld [vmem:[#allocation9] sm:$0xf]
        %v628 = vld [vmem:[#allocation9 + $0x4] sm:$0xf]
        %v629 = vld [vmem:[#allocation9 + $0x8] sm:$0xf]
        %v630 = vld [vmem:[#allocation9 + $0xc] sm:$0xf]
        %v631 = vld [vmem:[#allocation9 + $0x10] sm:$0xf]
        %v632 = vld [vmem:[#allocation9 + $0x14] sm:$0xf]
        %v633 = vld [vmem:[#allocation9 + $0x18] sm:$0xf]
        %v634 = vld [vmem:[#allocation9 + $0x1c] sm:$0xf]
        %v635 = vld [vmem:[#allocation9 + $0x20] sm:$0xf]
        %v636 = vld [vmem:[#allocation9 + $0x24] sm:$0xf]
        %v637 = vld [vmem:[#allocation9 + $0x28] sm:$0xf]
        %v638 = vld [vmem:[#allocation9 + $0x2c] sm:$0xf]
        %v639 = vld [vmem:[#allocation9 + $0x30] sm:$0xf]
        %v640 = vld [vmem:[#allocation9 + $0x34] sm:$0xf]
        %v641 = vld [vmem:[#allocation9 + $0x38] sm:$0xf]
        %v642 = vld [vmem:[#allocation9 + $0x3c] sm:$0xf]
        %v643 = vld [vmem:[%s4] sm:$0x1]
        %v645 = vperm.slane %v643, 0
        %v663 = vunpack.c.l.b16 %v627
        %v664 = vunpack.c.l.b16 %v628
        %v665 = vunpack.c.l.b16 %v629
        %v666 = vunpack.c.l.b16 %v630
        %v667 = vunpack.c.l.b16 %v631
        %v668 = vunpack.c.l.b16 %v632
        %v669 = vunpack.c.l.b16 %v633
        %v670 = vunpack.c.l.b16 %v634
        %v671 = vunpack.c.l.b16 %v635
        %v672 = vunpack.c.l.b16 %v636
        %v673 = vunpack.c.l.b16 %v637
        %v674 = vunpack.c.l.b16 %v638
        %v675 = vunpack.c.l.b16 %v639
        %v676 = vunpack.c.l.b16 %v640
        %v677 = vunpack.c.l.b16 %v641
        %v678 = vunpack.c.l.b16 %v642
        %v679 = vpack.c.b16 %v664, %v663
        %v680 = vpack.c.b16 %v666, %v665
        %v681 = vpack.c.b16 %v668, %v667
        %v682 = vpack.c.b16 %v670, %v669
        %v683 = vpack.c.b16 %v672, %v671
        %v684 = vpack.c.b16 %v674, %v673
        %v685 = vpack.c.b16 %v676, %v675
        %v686 = vpack.c.b16 %v678, %v677
        %695 = vmatpush.bf16.msra.mxu0 %v686
        %696 = vmatpush.bf16.msra.mxu0 %v685
        %697 = vmatpush.bf16.msra.mxu0 %v684
        %698 = vmatpush.bf16.msra.mxu0 %v683
        %699 = vmatpush.bf16.msra.mxu0 %v682
        %700 = vmatpush.bf16.msra.mxu0 %v681
        %701 = vmatpush.bf16.msra.mxu0 %v680
        %702 = vmatpush.bf16.msra.mxu0 %v679
        %703 = vmatmul.bf16.gmra.mxu0 %v571
        %v704 = vpop.f32.mrf.mxu0
        %v705 = vadd.f32 %v645, %v704
        %v706 = vpop.f32.mrf.mxu0
        %v707 = vadd.f32 %v645, %v706
        %708 = vmatmul.bf16.gmra.mxu0 %v605
        %v709 = vpop.f32.mrf.mxu0
        %v710 = vadd.f32 %v645, %v709
        %v711 = vpop.f32.mrf.mxu0
        %v712 = vadd.f32 %v645, %v711
        %713 = vmatmul.bf16.gmra.mxu0 %v606
        %v714 = vpop.f32.mrf.mxu0
        %v715 = vadd.f32 %v645, %v714
        %v716 = vpop.f32.mrf.mxu0
        %v717 = vadd.f32 %v645, %v716
        %718 = vmatmul.bf16.gmra.mxu0 %v607
        %v719 = vpop.f32.mrf.mxu0
        %v720 = vadd.f32 %v645, %v719
        %v721 = vpop.f32.mrf.mxu0
        %v722 = vadd.f32 %v645, %v721
        %723 = vmatmul.bf16.gmra.mxu0 %v608
        %v724 = vpop.f32.mrf.mxu0
        %v725 = vadd.f32 %v645, %v724
        %v726 = vpop.f32.mrf.mxu0
        %v727 = vadd.f32 %v645, %v726
        %728 = vmatmul.bf16.gmra.mxu0 %v609
        %v729 = vpop.f32.mrf.mxu0
        %v730 = vadd.f32 %v645, %v729
        %v731 = vpop.f32.mrf.mxu0
        %v732 = vadd.f32 %v645, %v731
        %733 = vmatmul.bf16.gmra.mxu0 %v610
        %v734 = vpop.f32.mrf.mxu0
        %v735 = vadd.f32 %v645, %v734
        %v736 = vpop.f32.mrf.mxu0
        %v737 = vadd.f32 %v645, %v736
        %738 = vmatmul.bf16.gmra.mxu0 %v611
        %v739 = vpop.f32.mrf.mxu0
        %v740 = vadd.f32 %v645, %v739
        %v741 = vpop.f32.mrf.mxu0
        %v742 = vadd.f32 %v645, %v741
        %743 = vmatmul.bf16.gmra.mxu0 %v612
        %v744 = vpop.f32.mrf.mxu0
        %v745 = vadd.f32 %v645, %v744
        %v746 = vpop.f32.mrf.mxu0
        %v747 = vadd.f32 %v645, %v746
        %748 = vmatmul.bf16.gmra.mxu0 %v625
        %v749 = vpop.f32.mrf.mxu0
        %v750 = vadd.f32 %v645, %v749
        %v751 = vpop.f32.mrf.mxu0
        %v752 = vadd.f32 %v645, %v751
        %753 = vdwg.mxu0
        %v754 = vpack.c.bf16 %v705, %v705
        %v755 = vpack.c.bf16 %v707, %v707
        %v756 = vpack.c.bf16 %v710, %v710
        %v757 = vpack.c.bf16 %v712, %v712
        %v758 = vpack.c.bf16 %v715, %v715
        %v759 = vpack.c.bf16 %v717, %v717
        %v760 = vpack.c.bf16 %v720, %v720
        %v761 = vpack.c.bf16 %v722, %v722
        %v762 = vpack.c.bf16 %v725, %v725
        %v763 = vpack.c.bf16 %v727, %v727
        %v764 = vpack.c.bf16 %v730, %v730
        %v765 = vpack.c.bf16 %v732, %v732
        %v766 = vpack.c.bf16 %v735, %v735
        %v767 = vpack.c.bf16 %v737, %v737
        %v768 = vpack.c.bf16 %v740, %v740
        %v769 = vpack.c.bf16 %v742, %v742
        %v770 = vpack.c.bf16 %v745, %v745
        %v771 = vpack.c.bf16 %v747, %v747
        %v772 = vpack.c.bf16 %v750, %v750
        %v773 = vpack.c.bf16 %v752, %v752
        %774 = vst [vmem:[#allocation2] sm:$0xf] %v754
        %775 = vst [vmem:[#allocation2 + $0x4] sm:$0xf] %v755
        %776 = vst [vmem:[#allocation2 + $0x8] sm:$0xf] %v756
        %777 = vst [vmem:[#allocation2 + $0xc] sm:$0xf] %v757
        %778 = vst [vmem:[#allocation2 + $0x10] sm:$0xf] %v758
        %779 = vst [vmem:[#allocation2 + $0x14] sm:$0xf] %v759
        %780 = vst [vmem:[#allocation2 + $0x18] sm:$0xf] %v760
        %781 = vst [vmem:[#allocation2 + $0x1c] sm:$0xf] %v761
        %782 = vst [vmem:[#allocation2 + $0x20] sm:$0xf] %v762
        %783 = vst [vmem:[#allocation2 + $0x24] sm:$0xf] %v763
        %784 = vst [vmem:[#allocation2 + $0x28] sm:$0xf] %v764
        %785 = vst [vmem:[#allocation2 + $0x2c] sm:$0xf] %v765
        %786 = vst [vmem:[#allocation2 + $0x30] sm:$0xf] %v766
        %787 = vst [vmem:[#allocation2 + $0x34] sm:$0xf] %v767
        %788 = vst [vmem:[#allocation2 + $0x38] sm:$0xf] %v768
        %789 = vst [vmem:[#allocation2 + $0x3c] sm:$0xf] %v769
        %790 = vst [vmem:[#allocation2 + $0x40] sm:$0xf] %v770
        %791 = vst [vmem:[#allocation2 + $0x44] sm:$0xf] %v771
        %792 = vst [vmem:[#allocation2 + $0x48] sm:$0xf] %v772
        %793 = vst [vmem:[#allocation2 + $0x4c] sm:$0xf] %v773
        %p794 = scmp.eq.s32.totalorder %s36, 0
        // Predicated region
        $region81: #{tpu_custom_call.1} parent=55 // pred_check
          %p795 = pneg %p794
        $region82: #{tpu_custom_call.1} parent=55 // pred_check_branch
          %797 = sbr.rel (%p795) target = $region84
        $region83: #{tpu_custom_call.1} parent=55 // pred_region
          %798 = vst [vmem:[#allocation2] sm:$0xf] 0
          %799 = vst [vmem:[#allocation2 + $0x4] sm:$0xf] 0
        $region84: #{tpu_custom_call.1} parent=55 // pred_fallthru
          _
        %p800 = scmp.eq.s32.totalorder %s36, 1
        // Predicated region
        $region85: #{tpu_custom_call.1} parent=55 // pred_check
          %p801 = pneg %p800
        $region86: #{tpu_custom_call.1} parent=55 // pred_check_branch
          %803 = sbr.rel (%p801) target = $region88
        $region87: #{tpu_custom_call.1} parent=55 // pred_region
          %804 = vst [vmem:[#allocation2 + $0x48] sm:$0xf] 0
          %805 = vst [vmem:[#allocation2 + $0x4c] sm:$0xf] 0
        $region88: #{tpu_custom_call.1} parent=55 // pred_fallthru
          _
        %v806 = vld [vmem:[#allocation11] sm:$0xff]
        %v807 = vld [vmem:[#allocation11 + $0x8] sm:$0x1]
        %v808 = vld [vmem:[%s6] sm:$0x1]
        %v809 = vld [vmem:[#allocation12] sm:$0xf]
        %v810 = vld [vmem:[#allocation12 + $0x4] sm:$0xf]
        %v811 = vld [vmem:[#allocation12 + $0x8] sm:$0xf]
        %v812 = vld [vmem:[#allocation12 + $0xc] sm:$0xf]
        %v813 = vld [vmem:[#allocation12 + $0x10] sm:$0xf]
        %v814 = vld [vmem:[#allocation12 + $0x14] sm:$0xf]
        %v815 = vld [vmem:[#allocation12 + $0x18] sm:$0xf]
        %v816 = vld [vmem:[#allocation12 + $0x1c] sm:$0xf]
        %v817 = vld [vmem:[#allocation12 + $0x20] sm:$0xf]
        %v818 = vld [vmem:[#allocation12 + $0x24] sm:$0xf]
        %v819 = vld [vmem:[#allocation12 + $0x28] sm:$0xf]
        %v820 = vld [vmem:[#allocation12 + $0x2c] sm:$0xf]
        %v821 = vld [vmem:[#allocation12 + $0x30] sm:$0xf]
        %v822 = vld [vmem:[#allocation12 + $0x34] sm:$0xf]
        %v823 = vld [vmem:[#allocation12 + $0x38] sm:$0xf]
        %v824 = vld [vmem:[#allocation12 + $0x3c] sm:$0xf]
        %v825 = vld [vmem:[%s8] sm:$0x1]
        %v826 = vlaneseq
        %v827 = vshrl.u32 %v826, 7
        %v828 = vadd.s32 %v827, 8
        %v829 = vadd.s32 %v827, 16
        %v830 = vadd.s32 %v827, 24
        %v831 = vadd.s32 %v827, 32
        %v832 = vadd.s32 %v827, 40
        %v833 = vadd.s32 %v827, 48
        %v834 = vadd.s32 %v827, 56
        %v835 = vadd.s32 %v827, 64
        %v836 = vadd.s32 %v827, 72
        %v837 = vadd.s32 %v827, 80
        %v838 = vadd.s32 %v827, 88
        %v839 = vadd.s32 %v827, 96
        %v840 = vadd.s32 %v827, 104
        %v841 = vadd.s32 %v827, 112
        %v842 = vadd.s32 %v827, 120
        %vm843 = vcmp.lt.s32.totalorder %v827, 0
        %v844 = vsub.s32 0, %v827
        %v845 = vsel %vm843, %v844, %v827
        %v846 = vshrl.u32 %v845, 4
        %v847 = vand.u32 %v845, 15
        %v848 = vsub.s32 0, %v847
        %v849 = vsel %vm843, %v848, %v847
        %vm850 = vcmp.lt.s32.totalorder %v828, 0
        %v851 = vsub.s32 0, %v828
        %v852 = vsel %vm850, %v851, %v828
        %v853 = vshrl.u32 %v852, 4
        %v854 = vand.u32 %v852, 15
        %v855 = vsub.s32 0, %v854
        %v856 = vsel %vm850, %v855, %v854
        %vm857 = vcmp.lt.s32.totalorder %v829, 0
        %v858 = vsub.s32 0, %v829
        %v859 = vsel %vm857, %v858, %v829
        %v860 = vshrl.u32 %v859, 4
        %v861 = vand.u32 %v859, 15
        %v862 = vsub.s32 0, %v861
        %v863 = vsel %vm857, %v862, %v861
        %vm864 = vcmp.lt.s32.totalorder %v830, 0
        %v865 = vsub.s32 0, %v830
        %v866 = vsel %vm864, %v865, %v830
        %v867 = vshrl.u32 %v866, 4
        %v868 = vand.u32 %v866, 15
        %v869 = vsub.s32 0, %v868
        %v870 = vsel %vm864, %v869, %v868
        %vm871 = vcmp.lt.s32.totalorder %v831, 0
        %v872 = vsub.s32 0, %v831
        %v873 = vsel %vm871, %v872, %v831
        %v874 = vshrl.u32 %v873, 4
        %v875 = vand.u32 %v873, 15
        %v876 = vsub.s32 0, %v875
        %v877 = vsel %vm871, %v876, %v875
        %vm878 = vcmp.lt.s32.totalorder %v832, 0
        %v879 = vsub.s32 0, %v832
        %v880 = vsel %vm878, %v879, %v832
        %v881 = vshrl.u32 %v880, 4
        %v882 = vand.u32 %v880, 15
        %v883 = vsub.s32 0, %v882
        %v884 = vsel %vm878, %v883, %v882
        %vm885 = vcmp.lt.s32.totalorder %v833, 0
        %v886 = vsub.s32 0, %v833
        %v887 = vsel %vm885, %v886, %v833
        %v888 = vshrl.u32 %v887, 4
        %v889 = vand.u32 %v887, 15
        %v890 = vsub.s32 0, %v889
        %v891 = vsel %vm885, %v890, %v889
        %vm892 = vcmp.lt.s32.totalorder %v834, 0
        %v893 = vsub.s32 0, %v834
        %v894 = vsel %vm892, %v893, %v834
        %v895 = vshrl.u32 %v894, 4
        %v896 = vand.u32 %v894, 15
        %v897 = vsub.s32 0, %v896
        %v898 = vsel %vm892, %v897, %v896
        %vm899 = vcmp.lt.s32.totalorder %v835, 0
        %v900 = vsub.s32 0, %v835
        %v901 = vsel %vm899, %v900, %v835
        %v902 = vshrl.u32 %v901, 4
        %v903 = vand.u32 %v901, 15
        %v904 = vsub.s32 0, %v903
        %v905 = vsel %vm899, %v904, %v903
        %vm906 = vcmp.lt.s32.totalorder %v836, 0
        %v907 = vsub.s32 0, %v836
        %v908 = vsel %vm906, %v907, %v836
        %v909 = vshrl.u32 %v908, 4
        %v910 = vand.u32 %v908, 15
        %v911 = vsub.s32 0, %v910
        %v912 = vsel %vm906, %v911, %v910
        %vm913 = vcmp.lt.s32.totalorder %v837, 0
        %v914 = vsub.s32 0, %v837
        %v915 = vsel %vm913, %v914, %v837
        %v916 = vshrl.u32 %v915, 4
        %v917 = vand.u32 %v915, 15
        %v918 = vsub.s32 0, %v917
        %v919 = vsel %vm913, %v918, %v917
        %vm920 = vcmp.lt.s32.totalorder %v838, 0
        %v921 = vsub.s32 0, %v838
        %v922 = vsel %vm920, %v921, %v838
        %v923 = vshrl.u32 %v922, 4
        %v924 = vand.u32 %v922, 15
        %v925 = vsub.s32 0, %v924
        %v926 = vsel %vm920, %v925, %v924
        %vm927 = vcmp.lt.s32.totalorder %v839, 0
        %v928 = vsub.s32 0, %v839
        %v929 = vsel %vm927, %v928, %v839
        %v930 = vshrl.u32 %v929, 4
        %v931 = vand.u32 %v929, 15
        %v932 = vsub.s32 0, %v931
        %v933 = vsel %vm927, %v932, %v931
        %vm934 = vcmp.lt.s32.totalorder %v840, 0
        %v935 = vsub.s32 0, %v840
        %v936 = vsel %vm934, %v935, %v840
        %v937 = vshrl.u32 %v936, 4
        %v938 = vand.u32 %v936, 15
        %v939 = vsub.s32 0, %v938
        %v940 = vsel %vm934, %v939, %v938
        %vm941 = vcmp.lt.s32.totalorder %v841, 0
        %v942 = vsub.s32 0, %v841
        %v943 = vsel %vm941, %v942, %v841
        %v944 = vshrl.u32 %v943, 4
        %v945 = vand.u32 %v943, 15
        %v946 = vsub.s32 0, %v945
        %v947 = vsel %vm941, %v946, %v945
        %vm948 = vcmp.lt.s32.totalorder %v842, 0
        %v949 = vsub.s32 0, %v842
        %v950 = vsel %vm948, %v949, %v842
        %v951 = vshrl.u32 %v950, 4
        %v952 = vand.u32 %v950, 15
        %v953 = vsub.s32 0, %v952
        %v954 = vsel %vm948, %v953, %v952
        %vm955 = vcmp.ne.s32.totalorder %v849, 0
        %vm956 = vcmp.ne.s32.totalorder %v856, 0
        %vm957 = vcmp.ne.s32.totalorder %v863, 0
        %vm958 = vcmp.ne.s32.totalorder %v870, 0
        %vm959 = vcmp.ne.s32.totalorder %v877, 0
        %vm960 = vcmp.ne.s32.totalorder %v884, 0
        %vm961 = vcmp.ne.s32.totalorder %v891, 0
        %vm962 = vcmp.ne.s32.totalorder %v898, 0
        %vm963 = vcmp.ne.s32.totalorder %v905, 0
        %vm964 = vcmp.ne.s32.totalorder %v912, 0
        %vm965 = vcmp.ne.s32.totalorder %v919, 0
        %vm966 = vcmp.ne.s32.totalorder %v926, 0
        %vm967 = vcmp.ne.s32.totalorder %v933, 0
        %vm968 = vcmp.ne.s32.totalorder %v940, 0
        %vm969 = vcmp.ne.s32.totalorder %v947, 0
        %vm970 = vcmp.ne.s32.totalorder %v954, 0
        %vm971 = vcmp.lt.s32.totalorder %v849, 0
        %vm972 = vcmp.lt.s32.totalorder %v856, 0
        %vm973 = vcmp.lt.s32.totalorder %v863, 0
        %vm974 = vcmp.lt.s32.totalorder %v870, 0
        %vm975 = vcmp.lt.s32.totalorder %v877, 0
        %vm976 = vcmp.lt.s32.totalorder %v884, 0
        %vm977 = vcmp.lt.s32.totalorder %v891, 0
        %vm978 = vcmp.lt.s32.totalorder %v898, 0
        %vm979 = vcmp.lt.s32.totalorder %v905, 0
        %vm980 = vcmp.lt.s32.totalorder %v912, 0
        %vm981 = vcmp.lt.s32.totalorder %v919, 0
        %vm982 = vcmp.lt.s32.totalorder %v926, 0
        %vm983 = vcmp.lt.s32.totalorder %v933, 0
        %vm984 = vcmp.lt.s32.totalorder %v940, 0
        %vm985 = vcmp.lt.s32.totalorder %v947, 0
        %vm986 = vcmp.lt.s32.totalorder %v954, 0
        %vm987 = vmand %vm971, %vm955
        %vm988 = vmand %vm972, %vm956
        %vm989 = vmand %vm973, %vm957
        %vm990 = vmand %vm974, %vm958
        %vm991 = vmand %vm975, %vm959
        %vm992 = vmand %vm976, %vm960
        %vm993 = vmand %vm977, %vm961
        %vm994 = vmand %vm978, %vm962
        %vm995 = vmand %vm979, %vm963
        %vm996 = vmand %vm980, %vm964
        %vm997 = vmand %vm981, %vm965
        %vm998 = vmand %vm982, %vm966
        %vm999 = vmand %vm983, %vm967
        %vm1000 = vmand %vm984, %vm968
        %vm1001 = vmand %vm985, %vm969
        %vm1002 = vmand %vm986, %vm970
        %v1003 = vadd.s32 %v849, 16
        %v1004 = vadd.s32 %v856, 16
        %v1005 = vadd.s32 %v863, 16
        %v1006 = vadd.s32 %v870, 16
        %v1007 = vadd.s32 %v877, 16
        %v1008 = vadd.s32 %v884, 16
        %v1009 = vadd.s32 %v891, 16
        %v1010 = vadd.s32 %v898, 16
        %v1011 = vadd.s32 %v905, 16
        %v1012 = vadd.s32 %v912, 16
        %v1013 = vadd.s32 %v919, 16
        %v1014 = vadd.s32 %v926, 16
        %v1015 = vadd.s32 %v933, 16
        %v1016 = vadd.s32 %v940, 16
        %v1017 = vadd.s32 %v947, 16
        %v1018 = vadd.s32 %v954, 16
        %v1019 = vsel %vm987, %v1003, %v849
        %v1020 = vsel %vm988, %v1004, %v856
        %v1021 = vsel %vm989, %v1005, %v863
        %v1022 = vsel %vm990, %v1006, %v870
        %v1023 = vsel %vm991, %v1007, %v877
        %v1024 = vsel %vm992, %v1008, %v884
        %v1025 = vsel %vm993, %v1009, %v891
        %v1026 = vsel %vm994, %v1010, %v898
        %v1027 = vsel %vm995, %v1011, %v905
        %v1028 = vsel %vm996, %v1012, %v912
        %v1029 = vsel %vm997, %v1013, %v919
        %v1030 = vsel %vm998, %v1014, %v926
        %v1031 = vsel %vm999, %v1015, %v933
        %v1032 = vsel %vm1000, %v1016, %v940
        %v1033 = vsel %vm1001, %v1017, %v947
        %v1034 = vsel %vm1002, %v1018, %v954
        %vm1035 = vcmp.gt.s32.totalorder %v1019, 0
        %vm1036 = vcmp.gt.s32.totalorder %v1020, 0
        %vm1037 = vcmp.gt.s32.totalorder %v1021, 0
        %vm1038 = vcmp.gt.s32.totalorder %v1022, 0
        %vm1039 = vcmp.gt.s32.totalorder %v1023, 0
        %vm1040 = vcmp.gt.s32.totalorder %v1024, 0
        %vm1041 = vcmp.gt.s32.totalorder %v1025, 0
        %vm1042 = vcmp.gt.s32.totalorder %v1026, 0
        %vm1043 = vcmp.gt.s32.totalorder %v1027, 0
        %vm1044 = vcmp.gt.s32.totalorder %v1028, 0
        %vm1045 = vcmp.gt.s32.totalorder %v1029, 0
        %vm1046 = vcmp.gt.s32.totalorder %v1030, 0
        %vm1047 = vcmp.gt.s32.totalorder %v1031, 0
        %vm1048 = vcmp.gt.s32.totalorder %v1032, 0
        %vm1049 = vcmp.gt.s32.totalorder %v1033, 0
        %vm1050 = vcmp.gt.s32.totalorder %v1034, 0
        %vm1051 = vcmp.lt.s32.totalorder %v1019, 15
        %vm1052 = vcmp.lt.s32.totalorder %v1020, 15
        %vm1053 = vcmp.lt.s32.totalorder %v1021, 15
        %vm1054 = vcmp.lt.s32.totalorder %v1022, 15
        %vm1055 = vcmp.lt.s32.totalorder %v1023, 15
        %vm1056 = vcmp.lt.s32.totalorder %v1024, 15
        %vm1057 = vcmp.lt.s32.totalorder %v1025, 15
        %vm1058 = vcmp.lt.s32.totalorder %v1026, 15
        %vm1059 = vcmp.lt.s32.totalorder %v1027, 15
        %vm1060 = vcmp.lt.s32.totalorder %v1028, 15
        %vm1061 = vcmp.lt.s32.totalorder %v1029, 15
        %vm1062 = vcmp.lt.s32.totalorder %v1030, 15
        %vm1063 = vcmp.lt.s32.totalorder %v1031, 15
        %vm1064 = vcmp.lt.s32.totalorder %v1032, 15
        %vm1065 = vcmp.lt.s32.totalorder %v1033, 15
        %vm1066 = vcmp.lt.s32.totalorder %v1034, 15
        %v1067 = vld [vmem:[#allocation2] sm:$0xf]
        %v1068 = vld [vmem:[#allocation2 + $0x4] sm:$0xf]
        %v1069 = vld [vmem:[#allocation2 + $0x8] sm:$0xf]
        %v1070 = vld [vmem:[#allocation2 + $0xc] sm:$0xf]
        %v1071 = vld [vmem:[#allocation2 + $0x10] sm:$0xf]
        %v1072 = vld [vmem:[#allocation2 + $0x14] sm:$0xf]
        %v1073 = vld [vmem:[#allocation2 + $0x18] sm:$0xf]
        %v1074 = vld [vmem:[#allocation2 + $0x1c] sm:$0xf]
        %v1075 = vld [vmem:[#allocation2 + $0x20] sm:$0xf]
        %v1076 = vld [vmem:[#allocation2 + $0x24] sm:$0xf]
        %v1077 = vld [vmem:[#allocation2 + $0x28] sm:$0xf]
        %v1078 = vld [vmem:[#allocation2 + $0x2c] sm:$0xf]
        %v1079 = vld [vmem:[#allocation2 + $0x30] sm:$0xf]
        %v1080 = vld [vmem:[#allocation2 + $0x34] sm:$0xf]
        %v1081 = vld [vmem:[#allocation2 + $0x38] sm:$0xf]
        %v1082 = vld [vmem:[#allocation2 + $0x3c] sm:$0xf]
        %v1083 = vunpack.c.l.bf16 %v1067
        %v1084 = vunpack.c.l.bf16 %v1068
        %v1085 = vunpack.c.l.bf16 %v1069
        %v1086 = vunpack.c.l.bf16 %v1070
        %v1087 = vunpack.c.l.bf16 %v1071
        %v1088 = vunpack.c.l.bf16 %v1072
        %v1089 = vunpack.c.l.bf16 %v1073
        %v1090 = vunpack.c.l.bf16 %v1074
        %v1091 = vunpack.c.l.bf16 %v1075
        %v1092 = vunpack.c.l.bf16 %v1076
        %v1093 = vunpack.c.l.bf16 %v1077
        %v1094 = vunpack.c.l.bf16 %v1078
        %v1095 = vunpack.c.l.bf16 %v1079
        %v1096 = vunpack.c.l.bf16 %v1080
        %v1097 = vunpack.c.l.bf16 %v1081
        %v1098 = vunpack.c.l.bf16 %v1082
        %v1099 = vrot.slane %v1083, 7
        %v1100 = vrot.slane %v1084, 7
        %v1101 = vrot.slane %v1085, 7
        %v1102 = vrot.slane %v1086, 7
        %v1103 = vrot.slane %v1087, 7
        %v1104 = vrot.slane %v1088, 7
        %v1105 = vrot.slane %v1089, 7
        %v1106 = vrot.slane %v1090, 7
        %v1107 = vrot.slane %v1091, 7
        %v1108 = vrot.slane %v1092, 7
        %v1109 = vrot.slane %v1093, 7
        %v1110 = vrot.slane %v1094, 7
        %v1111 = vrot.slane %v1095, 7
        %v1112 = vrot.slane %v1096, 7
        %v1113 = vrot.slane %v1097, 7
        %v1114 = vrot.slane %v1098, 7
        %vm1115 = vcmp.lt.s32.totalorder %v827, 1
        %v1116 = vsel %vm1115, %v1113, %v1114
        %v1117 = vsel %vm1115, %v1112, %v1113
        %v1118 = vsel %vm1115, %v1111, %v1112
        %v1119 = vsel %vm1115, %v1110, %v1111
        %v1120 = vsel %vm1115, %v1109, %v1110
        %v1121 = vsel %vm1115, %v1108, %v1109
        %v1122 = vsel %vm1115, %v1107, %v1108
        %v1123 = vsel %vm1115, %v1106, %v1107
        %v1124 = vsel %vm1115, %v1105, %v1106
        %v1125 = vsel %vm1115, %v1104, %v1105
        %v1126 = vsel %vm1115, %v1103, %v1104
        %v1127 = vsel %vm1115, %v1102, %v1103
        %v1128 = vsel %vm1115, %v1101, %v1102
        %v1129 = vsel %vm1115, %v1100, %v1101
        %v1130 = vsel %vm1115, %v1099, %v1100
        %v1131 = vsel %vm1115, %v1114, %v1099
        %v1132 = vperm.slane %v806, 0
        %v1133 = vmul.f32 %v1131, %v1132
        %v1134 = vmul.f32 %v1130, %v1132
        %v1135 = vmul.f32 %v1129, %v1132
        %v1136 = vmul.f32 %v1128, %v1132
        %v1137 = vmul.f32 %v1127, %v1132
        %v1138 = vmul.f32 %v1126, %v1132
        %v1139 = vmul.f32 %v1125, %v1132
        %v1140 = vmul.f32 %v1124, %v1132
        %v1141 = vmul.f32 %v1123, %v1132
        %v1142 = vmul.f32 %v1122, %v1132
        %v1143 = vmul.f32 %v1121, %v1132
        %v1144 = vmul.f32 %v1120, %v1132
        %v1145 = vmul.f32 %v1119, %v1132
        %v1146 = vmul.f32 %v1118, %v1132
        %v1147 = vmul.f32 %v1117, %v1132
        %v1148 = vmul.f32 %v1116, %v1132
        %v1149 = vadd.f32 %v1133, 0.0
        %v1150 = vadd.f32 %v1134, 0.0
        %v1151 = vadd.f32 %v1135, 0.0
        %v1152 = vadd.f32 %v1136, 0.0
        %v1153 = vadd.f32 %v1137, 0.0
        %v1154 = vadd.f32 %v1138, 0.0
        %v1155 = vadd.f32 %v1139, 0.0
        %v1156 = vadd.f32 %v1140, 0.0
        %v1157 = vadd.f32 %v1141, 0.0
        %v1158 = vadd.f32 %v1142, 0.0
        %v1159 = vadd.f32 %v1143, 0.0
        %v1160 = vadd.f32 %v1144, 0.0
        %v1161 = vadd.f32 %v1145, 0.0
        %v1162 = vadd.f32 %v1146, 0.0
        %v1163 = vadd.f32 %v1147, 0.0
        %v1164 = vadd.f32 %v1148, 0.0
        %v1165 = vperm.slane %v806, 1
        %v1166 = vmul.f32 %v1083, %v1165
        %v1167 = vmul.f32 %v1084, %v1165
        %v1168 = vmul.f32 %v1085, %v1165
        %v1169 = vmul.f32 %v1086, %v1165
        %v1170 = vmul.f32 %v1087, %v1165
        %v1171 = vmul.f32 %v1088, %v1165
        %v1172 = vmul.f32 %v1089, %v1165
        %v1173 = vmul.f32 %v1090, %v1165
        %v1174 = vmul.f32 %v1091, %v1165
        %v1175 = vmul.f32 %v1092, %v1165
        %v1176 = vmul.f32 %v1093, %v1165
        %v1177 = vmul.f32 %v1094, %v1165
        %v1178 = vmul.f32 %v1095, %v1165
        %v1179 = vmul.f32 %v1096, %v1165
        %v1180 = vmul.f32 %v1097, %v1165
        %v1181 = vmul.f32 %v1098, %v1165
        %v1182 = vadd.f32 %v1166, 0.0
        %v1183 = vadd.f32 %v1167, 0.0
        %v1184 = vadd.f32 %v1168, 0.0
        %v1185 = vadd.f32 %v1169, 0.0
        %v1186 = vadd.f32 %v1170, 0.0
        %v1187 = vadd.f32 %v1171, 0.0
        %v1188 = vadd.f32 %v1172, 0.0
        %v1189 = vadd.f32 %v1173, 0.0
        %v1190 = vadd.f32 %v1174, 0.0
        %v1191 = vadd.f32 %v1175, 0.0
        %v1192 = vadd.f32 %v1176, 0.0
        %v1193 = vadd.f32 %v1177, 0.0
        %v1194 = vadd.f32 %v1178, 0.0
        %v1195 = vadd.f32 %v1179, 0.0
        %v1196 = vadd.f32 %v1180, 0.0
        %v1197 = vadd.f32 %v1181, 0.0
        %v1198 = vrot.slane %v1083, 1
        %v1199 = vrot.slane %v1084, 1
        %v1200 = vrot.slane %v1085, 1
        %v1201 = vrot.slane %v1086, 1
        %v1202 = vrot.slane %v1087, 1
        %v1203 = vrot.slane %v1088, 1
        %v1204 = vrot.slane %v1089, 1
        %v1205 = vrot.slane %v1090, 1
        %v1206 = vrot.slane %v1091, 1
        %v1207 = vrot.slane %v1092, 1
        %v1208 = vrot.slane %v1093, 1
        %v1209 = vrot.slane %v1094, 1
        %v1210 = vrot.slane %v1095, 1
        %v1211 = vrot.slane %v1096, 1
        %v1212 = vrot.slane %v1097, 1
        %v1213 = vrot.slane %v1098, 1
        %vm1214 = vcmp.lt.s32.totalorder %v827, 7
        %v1215 = vsel %vm1214, %v1212, %v1213
        %v1216 = vsel %vm1214, %v1211, %v1212
        %v1217 = vsel %vm1214, %v1210, %v1211
        %v1218 = vsel %vm1214, %v1209, %v1210
        %v1219 = vsel %vm1214, %v1208, %v1209
        %v1220 = vsel %vm1214, %v1207, %v1208
        %v1221 = vsel %vm1214, %v1206, %v1207
        %v1222 = vsel %vm1214, %v1205, %v1206
        %v1223 = vsel %vm1214, %v1204, %v1205
        %v1224 = vsel %vm1214, %v1203, %v1204
        %v1225 = vsel %vm1214, %v1202, %v1203
        %v1226 = vsel %vm1214, %v1201, %v1202
        %v1227 = vsel %vm1214, %v1200, %v1201
        %v1228 = vsel %vm1214, %v1199, %v1200
        %v1229 = vsel %vm1214, %v1198, %v1199
        %v1230 = vsel %vm1214, %v1213, %v1198
        %v1231 = vperm.slane %v806, 2
        %v1232 = vmul.f32 %v1229, %v1231
        %v1233 = vmul.f32 %v1228, %v1231
        %v1234 = vmul.f32 %v1227, %v1231
        %v1235 = vmul.f32 %v1226, %v1231
        %v1236 = vmul.f32 %v1225, %v1231
        %v1237 = vmul.f32 %v1224, %v1231
        %v1238 = vmul.f32 %v1223, %v1231
        %v1239 = vmul.f32 %v1222, %v1231
        %v1240 = vmul.f32 %v1221, %v1231
        %v1241 = vmul.f32 %v1220, %v1231
        %v1242 = vmul.f32 %v1219, %v1231
        %v1243 = vmul.f32 %v1218, %v1231
        %v1244 = vmul.f32 %v1217, %v1231
        %v1245 = vmul.f32 %v1216, %v1231
        %v1246 = vmul.f32 %v1215, %v1231
        %v1247 = vmul.f32 %v1230, %v1231
        %v1248 = vadd.f32 %v1232, 0.0
        %v1249 = vadd.f32 %v1233, 0.0
        %v1250 = vadd.f32 %v1234, 0.0
        %v1251 = vadd.f32 %v1235, 0.0
        %v1252 = vadd.f32 %v1236, 0.0
        %v1253 = vadd.f32 %v1237, 0.0
        %v1254 = vadd.f32 %v1238, 0.0
        %v1255 = vadd.f32 %v1239, 0.0
        %v1256 = vadd.f32 %v1240, 0.0
        %v1257 = vadd.f32 %v1241, 0.0
        %v1258 = vadd.f32 %v1242, 0.0
        %v1259 = vadd.f32 %v1243, 0.0
        %v1260 = vadd.f32 %v1244, 0.0
        %v1261 = vadd.f32 %v1245, 0.0
        %v1262 = vadd.f32 %v1246, 0.0
        %v1263 = vadd.f32 %v1247, 0.0
        %v1264 = vld [vmem:[#allocation2 + $0x40] sm:$0xf]
        %v1265 = vld [vmem:[#allocation2 + $0x44] sm:$0xf]
        %v1266 = vunpack.c.l.bf16 %v1264
        %v1267 = vunpack.c.l.bf16 %v1265
        %v1268 = vrot.slane %v1266, 7
        %v1269 = vrot.slane %v1267, 7
        %v1270 = vsel %vm1115, %v1268, %v1269
        %v1271 = vsel %vm1115, %v1114, %v1268
        %v1272 = vsel %vm1115, %v1269, %v1101
        %v1273 = vperm.slane %v806, 3
        %v1274 = vmul.f32 %v1272, %v1273
        %v1275 = vmul.f32 %v1128, %v1273
        %v1276 = vmul.f32 %v1127, %v1273
        %v1277 = vmul.f32 %v1126, %v1273
        %v1278 = vmul.f32 %v1125, %v1273
        %v1279 = vmul.f32 %v1124, %v1273
        %v1280 = vmul.f32 %v1123, %v1273
        %v1281 = vmul.f32 %v1122, %v1273
        %v1282 = vmul.f32 %v1121, %v1273
        %v1283 = vmul.f32 %v1120, %v1273
        %v1284 = vmul.f32 %v1119, %v1273
        %v1285 = vmul.f32 %v1118, %v1273
        %v1286 = vmul.f32 %v1117, %v1273
        %v1287 = vmul.f32 %v1116, %v1273
        %v1288 = vmul.f32 %v1271, %v1273
        %v1289 = vmul.f32 %v1270, %v1273
        %v1290 = vadd.f32 %v1149, %v1274
        %v1291 = vadd.f32 %v1150, %v1275
        %v1292 = vadd.f32 %v1151, %v1276
        %v1293 = vadd.f32 %v1152, %v1277
        %v1294 = vadd.f32 %v1153, %v1278
        %v1295 = vadd.f32 %v1154, %v1279
        %v1296 = vadd.f32 %v1155, %v1280
        %v1297 = vadd.f32 %v1156, %v1281
        %v1298 = vadd.f32 %v1157, %v1282
        %v1299 = vadd.f32 %v1158, %v1283
        %v1300 = vadd.f32 %v1159, %v1284
        %v1301 = vadd.f32 %v1160, %v1285
        %v1302 = vadd.f32 %v1161, %v1286
        %v1303 = vadd.f32 %v1162, %v1287
        %v1304 = vadd.f32 %v1163, %v1288
        %v1305 = vadd.f32 %v1164, %v1289
        %v1306 = vperm.slane %v806, 4
        %v1307 = vmul.f32 %v1085, %v1306
        %v1308 = vmul.f32 %v1086, %v1306
        %v1309 = vmul.f32 %v1087, %v1306
        %v1310 = vmul.f32 %v1088, %v1306
        %v1311 = vmul.f32 %v1089, %v1306
        %v1312 = vmul.f32 %v1090, %v1306
        %v1313 = vmul.f32 %v1091, %v1306
        %v1314 = vmul.f32 %v1092, %v1306
        %v1315 = vmul.f32 %v1093, %v1306
        %v1316 = vmul.f32 %v1094, %v1306
        %v1317 = vmul.f32 %v1095, %v1306
        %v1318 = vmul.f32 %v1096, %v1306
        %v1319 = vmul.f32 %v1097, %v1306
        %v1320 = vmul.f32 %v1098, %v1306
        %v1321 = vmul.f32 %v1266, %v1306
        %v1322 = vmul.f32 %v1267, %v1306
        %v1323 = vadd.f32 %v1182, %v1307
        %v1324 = vadd.f32 %v1183, %v1308
        %v1325 = vadd.f32 %v1184, %v1309
        %v1326 = vadd.f32 %v1185, %v1310
        %v1327 = vadd.f32 %v1186, %v1311
        %v1328 = vadd.f32 %v1187, %v1312
        %v1329 = vadd.f32 %v1188, %v1313
        %v1330 = vadd.f32 %v1189, %v1314
        %v1331 = vadd.f32 %v1190, %v1315
        %v1332 = vadd.f32 %v1191, %v1316
        %v1333 = vadd.f32 %v1192, %v1317
        %v1334 = vadd.f32 %v1193, %v1318
        %v1335 = vadd.f32 %v1194, %v1319
        %v1336 = vadd.f32 %v1195, %v1320
        %v1337 = vadd.f32 %v1196, %v1321
        %v1338 = vadd.f32 %v1197, %v1322
        %v1339 = vrot.slane %v1266, 1
        %v1340 = vrot.slane %v1267, 1
        %v1341 = vsel %vm1214, %v1339, %v1340
        %v1342 = vsel %vm1214, %v1213, %v1339
        %v1343 = vsel %vm1214, %v1340, %v1200
        %v1344 = vperm.slane %v806, 5
        %v1345 = vmul.f32 %v1227, %v1344
        %v1346 = vmul.f32 %v1226, %v1344
        %v1347 = vmul.f32 %v1225, %v1344
        %v1348 = vmul.f32 %v1224, %v1344
        %v1349 = vmul.f32 %v1223, %v1344
        %v1350 = vmul.f32 %v1222, %v1344
        %v1351 = vmul.f32 %v1221, %v1344
        %v1352 = vmul.f32 %v1220, %v1344
        %v1353 = vmul.f32 %v1219, %v1344
        %v1354 = vmul.f32 %v1218, %v1344
        %v1355 = vmul.f32 %v1217, %v1344
        %v1356 = vmul.f32 %v1216, %v1344
        %v1357 = vmul.f32 %v1215, %v1344
        %v1358 = vmul.f32 %v1342, %v1344
        %v1359 = vmul.f32 %v1341, %v1344
        %v1360 = vmul.f32 %v1343, %v1344
        %v1361 = vadd.f32 %v1248, %v1345
        %v1362 = vadd.f32 %v1249, %v1346
        %v1363 = vadd.f32 %v1250, %v1347
        %v1364 = vadd.f32 %v1251, %v1348
        %v1365 = vadd.f32 %v1252, %v1349
        %v1366 = vadd.f32 %v1253, %v1350
        %v1367 = vadd.f32 %v1254, %v1351
        %v1368 = vadd.f32 %v1255, %v1352
        %v1369 = vadd.f32 %v1256, %v1353
        %v1370 = vadd.f32 %v1257, %v1354
        %v1371 = vadd.f32 %v1258, %v1355
        %v1372 = vadd.f32 %v1259, %v1356
        %v1373 = vadd.f32 %v1260, %v1357
        %v1374 = vadd.f32 %v1261, %v1358
        %v1375 = vadd.f32 %v1262, %v1359
        %v1376 = vadd.f32 %v1263, %v1360
        %v1377 = vld [vmem:[#allocation2 + $0x10] sm:$0xf]
        %v1378 = vld [vmem:[#allocation2 + $0x14] sm:$0xf]
        %v1379 = vld [vmem:[#allocation2 + $0x18] sm:$0xf]
        %v1380 = vld [vmem:[#allocation2 + $0x1c] sm:$0xf]
        %v1381 = vld [vmem:[#allocation2 + $0x20] sm:$0xf]
        %v1382 = vld [vmem:[#allocation2 + $0x24] sm:$0xf]
        %v1383 = vld [vmem:[#allocation2 + $0x28] sm:$0xf]
        %v1384 = vld [vmem:[#allocation2 + $0x2c] sm:$0xf]
        %v1385 = vld [vmem:[#allocation2 + $0x30] sm:$0xf]
        %v1386 = vld [vmem:[#allocation2 + $0x34] sm:$0xf]
        %v1387 = vld [vmem:[#allocation2 + $0x38] sm:$0xf]
        %v1388 = vld [vmem:[#allocation2 + $0x3c] sm:$0xf]
        %v1389 = vld [vmem:[#allocation2 + $0x40] sm:$0xf]
        %v1390 = vld [vmem:[#allocation2 + $0x44] sm:$0xf]
        %v1391 = vld [vmem:[#allocation2 + $0x48] sm:$0xf]
        %v1392 = vld [vmem:[#allocation2 + $0x4c] sm:$0xf]
        %v1393 = vunpack.c.l.bf16 %v1377
        %v1394 = vunpack.c.l.bf16 %v1378
        %v1395 = vunpack.c.l.bf16 %v1379
        %v1396 = vunpack.c.l.bf16 %v1380
        %v1397 = vunpack.c.l.bf16 %v1381
        %v1398 = vunpack.c.l.bf16 %v1382
        %v1399 = vunpack.c.l.bf16 %v1383
        %v1400 = vunpack.c.l.bf16 %v1384
        %v1401 = vunpack.c.l.bf16 %v1385
        %v1402 = vunpack.c.l.bf16 %v1386
        %v1403 = vunpack.c.l.bf16 %v1387
        %v1404 = vunpack.c.l.bf16 %v1388
        %v1405 = vunpack.c.l.bf16 %v1389
        %v1406 = vunpack.c.l.bf16 %v1390
        %v1407 = vunpack.c.l.bf16 %v1391
        %v1408 = vunpack.c.l.bf16 %v1392
        %v1409 = vrot.slane %v1393, 7
        %v1410 = vrot.slane %v1394, 7
        %v1411 = vrot.slane %v1395, 7
        %v1412 = vrot.slane %v1396, 7
        %v1413 = vrot.slane %v1397, 7
        %v1414 = vrot.slane %v1398, 7
        %v1415 = vrot.slane %v1399, 7
        %v1416 = vrot.slane %v1400, 7
        %v1417 = vrot.slane %v1401, 7
        %v1418 = vrot.slane %v1402, 7
        %v1419 = vrot.slane %v1403, 7
        %v1420 = vrot.slane %v1404, 7
        %v1421 = vrot.slane %v1405, 7
        %v1422 = vrot.slane %v1406, 7
        %v1423 = vrot.slane %v1407, 7
        %v1424 = vrot.slane %v1408, 7
        %v1425 = vsel %vm1115, %v1423, %v1424
        %v1426 = vsel %vm1115, %v1422, %v1423
        %v1427 = vsel %vm1115, %v1421, %v1422
        %v1428 = vsel %vm1115, %v1420, %v1421
        %v1429 = vsel %vm1115, %v1419, %v1420
        %v1430 = vsel %vm1115, %v1418, %v1419
        %v1431 = vsel %vm1115, %v1417, %v1418
        %v1432 = vsel %vm1115, %v1416, %v1417
        %v1433 = vsel %vm1115, %v1415, %v1416
        %v1434 = vsel %vm1115, %v1414, %v1415
        %v1435 = vsel %vm1115, %v1413, %v1414
        %v1436 = vsel %vm1115, %v1412, %v1413
        %v1437 = vsel %vm1115, %v1411, %v1412
        %v1438 = vsel %vm1115, %v1410, %v1411
        %v1439 = vsel %vm1115, %v1409, %v1410
        %v1440 = vsel %vm1115, %v1424, %v1409
        %v1441 = vperm.slane %v806, 6
        %v1442 = vmul.f32 %v1440, %v1441
        %v1443 = vmul.f32 %v1439, %v1441
        %v1444 = vmul.f32 %v1438, %v1441
        %v1445 = vmul.f32 %v1437, %v1441
        %v1446 = vmul.f32 %v1436, %v1441
        %v1447 = vmul.f32 %v1435, %v1441
        %v1448 = vmul.f32 %v1434, %v1441
        %v1449 = vmul.f32 %v1433, %v1441
        %v1450 = vmul.f32 %v1432, %v1441
        %v1451 = vmul.f32 %v1431, %v1441
        %v1452 = vmul.f32 %v1430, %v1441
        %v1453 = vmul.f32 %v1429, %v1441
        %v1454 = vmul.f32 %v1428, %v1441
        %v1455 = vmul.f32 %v1427, %v1441
        %v1456 = vmul.f32 %v1426, %v1441
        %v1457 = vmul.f32 %v1425, %v1441
        %v1458 = vadd.f32 %v1290, %v1442
        %v1459 = vadd.f32 %v1291, %v1443
        %v1460 = vadd.f32 %v1292, %v1444
        %v1461 = vadd.f32 %v1293, %v1445
        %v1462 = vadd.f32 %v1294, %v1446
        %v1463 = vadd.f32 %v1295, %v1447
        %v1464 = vadd.f32 %v1296, %v1448
        %v1465 = vadd.f32 %v1297, %v1449
        %v1466 = vadd.f32 %v1298, %v1450
        %v1467 = vadd.f32 %v1299, %v1451
        %v1468 = vadd.f32 %v1300, %v1452
        %v1469 = vadd.f32 %v1301, %v1453
        %v1470 = vadd.f32 %v1302, %v1454
        %v1471 = vadd.f32 %v1303, %v1455
        %v1472 = vadd.f32 %v1304, %v1456
        %v1473 = vadd.f32 %v1305, %v1457
        %v1474 = vperm.slane %v806, 7
        %v1475 = vmul.f32 %v1393, %v1474
        %v1476 = vmul.f32 %v1394, %v1474
        %v1477 = vmul.f32 %v1395, %v1474
        %v1478 = vmul.f32 %v1396, %v1474
        %v1479 = vmul.f32 %v1397, %v1474
        %v1480 = vmul.f32 %v1398, %v1474
        %v1481 = vmul.f32 %v1399, %v1474
        %v1482 = vmul.f32 %v1400, %v1474
        %v1483 = vmul.f32 %v1401, %v1474
        %v1484 = vmul.f32 %v1402, %v1474
        %v1485 = vmul.f32 %v1403, %v1474
        %v1486 = vmul.f32 %v1404, %v1474
        %v1487 = vmul.f32 %v1405, %v1474
        %v1488 = vmul.f32 %v1406, %v1474
        %v1489 = vmul.f32 %v1407, %v1474
        %v1490 = vmul.f32 %v1408, %v1474
        %v1491 = vadd.f32 %v1323, %v1475
        %v1492 = vadd.f32 %v1324, %v1476
        %v1493 = vadd.f32 %v1325, %v1477
        %v1494 = vadd.f32 %v1326, %v1478
        %v1495 = vadd.f32 %v1327, %v1479
        %v1496 = vadd.f32 %v1328, %v1480
        %v1497 = vadd.f32 %v1329, %v1481
        %v1498 = vadd.f32 %v1330, %v1482
        %v1499 = vadd.f32 %v1331, %v1483
        %v1500 = vadd.f32 %v1332, %v1484
        %v1501 = vadd.f32 %v1333, %v1485
        %v1502 = vadd.f32 %v1334, %v1486
        %v1503 = vadd.f32 %v1335, %v1487
        %v1504 = vadd.f32 %v1336, %v1488
        %v1505 = vadd.f32 %v1337, %v1489
        %v1506 = vadd.f32 %v1338, %v1490
        %v1507 = vrot.slane %v1393, 1
        %v1508 = vrot.slane %v1394, 1
        %v1509 = vrot.slane %v1395, 1
        %v1510 = vrot.slane %v1396, 1
        %v1511 = vrot.slane %v1397, 1
        %v1512 = vrot.slane %v1398, 1
        %v1513 = vrot.slane %v1399, 1
        %v1514 = vrot.slane %v1400, 1
        %v1515 = vrot.slane %v1401, 1
        %v1516 = vrot.slane %v1402, 1
        %v1517 = vrot.slane %v1403, 1
        %v1518 = vrot.slane %v1404, 1
        %v1519 = vrot.slane %v1405, 1
        %v1520 = vrot.slane %v1406, 1
        %v1521 = vrot.slane %v1407, 1
        %v1522 = vrot.slane %v1408, 1
        %v1523 = vsel %vm1214, %v1521, %v1522
        %v1524 = vsel %vm1214, %v1520, %v1521
        %v1525 = vsel %vm1214, %v1519, %v1520
        %v1526 = vsel %vm1214, %v1518, %v1519
        %v1527 = vsel %vm1214, %v1517, %v1518
        %v1528 = vsel %vm1214, %v1516, %v1517
        %v1529 = vsel %vm1214, %v1515, %v1516
        %v1530 = vsel %vm1214, %v1514, %v1515
        %v1531 = vsel %vm1214, %v1513, %v1514
        %v1532 = vsel %vm1214, %v1512, %v1513
        %v1533 = vsel %vm1214, %v1511, %v1512
        %v1534 = vsel %vm1214, %v1510, %v1511
        %v1535 = vsel %vm1214, %v1509, %v1510
        %v1536 = vsel %vm1214, %v1508, %v1509
        %v1537 = vsel %vm1214, %v1507, %v1508
        %v1538 = vsel %vm1214, %v1522, %v1507
        %v1539 = vperm.slane %v807, 0
        %v1540 = vmul.f32 %v1537, %v1539
        %v1541 = vmul.f32 %v1536, %v1539
        %v1542 = vmul.f32 %v1535, %v1539
        %v1543 = vmul.f32 %v1534, %v1539
        %v1544 = vmul.f32 %v1533, %v1539
        %v1545 = vmul.f32 %v1532, %v1539
        %v1546 = vmul.f32 %v1531, %v1539
        %v1547 = vmul.f32 %v1530, %v1539
        %v1548 = vmul.f32 %v1529, %v1539
        %v1549 = vmul.f32 %v1528, %v1539
        %v1550 = vmul.f32 %v1527, %v1539
        %v1551 = vmul.f32 %v1526, %v1539
        %v1552 = vmul.f32 %v1525, %v1539
        %v1553 = vmul.f32 %v1524, %v1539
        %v1554 = vmul.f32 %v1523, %v1539
        %v1555 = vmul.f32 %v1538, %v1539
        %v1556 = vadd.f32 %v1361, %v1540
        %v1557 = vadd.f32 %v1362, %v1541
        %v1558 = vadd.f32 %v1363, %v1542
        %v1559 = vadd.f32 %v1364, %v1543
        %v1560 = vadd.f32 %v1365, %v1544
        %v1561 = vadd.f32 %v1366, %v1545
        %v1562 = vadd.f32 %v1367, %v1546
        %v1563 = vadd.f32 %v1368, %v1547
        %v1564 = vadd.f32 %v1369, %v1548
        %v1565 = vadd.f32 %v1370, %v1549
        %v1566 = vadd.f32 %v1371, %v1550
        %v1567 = vadd.f32 %v1372, %v1551
        %v1568 = vadd.f32 %v1373, %v1552
        %v1569 = vadd.f32 %v1374, %v1553
        %v1570 = vadd.f32 %v1375, %v1554
        %v1571 = vadd.f32 %v1376, %v1555
        %v1572 = vsel %vm1035, 1, 0
        %v1573 = vsel %vm1036, 1, 0
        %v1574 = vsel %vm1037, 1, 0
        %v1575 = vsel %vm1038, 1, 0
        %v1576 = vsel %vm1039, 1, 0
        %v1577 = vsel %vm1040, 1, 0
        %v1578 = vsel %vm1041, 1, 0
        %v1579 = vsel %vm1042, 1, 0
        %v1580 = vsel %vm1043, 1, 0
        %v1581 = vsel %vm1044, 1, 0
        %v1582 = vsel %vm1045, 1, 0
        %v1583 = vsel %vm1046, 1, 0
        %v1584 = vsel %vm1047, 1, 0
        %v1585 = vsel %vm1048, 1, 0
        %v1586 = vsel %vm1049, 1, 0
        %v1587 = vsel %vm1050, 1, 0
        %vm1588 = vcmp.eq.s32.totalorder %v1572, 1
        %vm1589 = vcmp.eq.s32.totalorder %v1573, 1
        %vm1590 = vcmp.eq.s32.totalorder %v1574, 1
        %vm1591 = vcmp.eq.s32.totalorder %v1575, 1
        %vm1592 = vcmp.eq.s32.totalorder %v1576, 1
        %vm1593 = vcmp.eq.s32.totalorder %v1577, 1
        %vm1594 = vcmp.eq.s32.totalorder %v1578, 1
        %vm1595 = vcmp.eq.s32.totalorder %v1579, 1
        %vm1596 = vcmp.eq.s32.totalorder %v1580, 1
        %vm1597 = vcmp.eq.s32.totalorder %v1581, 1
        %vm1598 = vcmp.eq.s32.totalorder %v1582, 1
        %vm1599 = vcmp.eq.s32.totalorder %v1583, 1
        %vm1600 = vcmp.eq.s32.totalorder %v1584, 1
        %vm1601 = vcmp.eq.s32.totalorder %v1585, 1
        %vm1602 = vcmp.eq.s32.totalorder %v1586, 1
        %vm1603 = vcmp.eq.s32.totalorder %v1587, 1
        %v1604 = vsel %vm1588, %v1458, 0.0
        %v1605 = vsel %vm1589, %v1459, 0.0
        %v1606 = vsel %vm1590, %v1460, 0.0
        %v1607 = vsel %vm1591, %v1461, 0.0
        %v1608 = vsel %vm1592, %v1462, 0.0
        %v1609 = vsel %vm1593, %v1463, 0.0
        %v1610 = vsel %vm1594, %v1464, 0.0
        %v1611 = vsel %vm1595, %v1465, 0.0
        %v1612 = vsel %vm1596, %v1466, 0.0
        %v1613 = vsel %vm1597, %v1467, 0.0
        %v1614 = vsel %vm1598, %v1468, 0.0
        %v1615 = vsel %vm1599, %v1469, 0.0
        %v1616 = vsel %vm1600, %v1470, 0.0
        %v1617 = vsel %vm1601, %v1471, 0.0
        %v1618 = vsel %vm1602, %v1472, 0.0
        %v1619 = vsel %vm1603, %v1473, 0.0
        %v1620 = vadd.f32 %v1491, %v1604
        %v1621 = vadd.f32 %v1492, %v1605
        %v1622 = vadd.f32 %v1493, %v1606
        %v1623 = vadd.f32 %v1494, %v1607
        %v1624 = vadd.f32 %v1495, %v1608
        %v1625 = vadd.f32 %v1496, %v1609
        %v1626 = vadd.f32 %v1497, %v1610
        %v1627 = vadd.f32 %v1498, %v1611
        %v1628 = vadd.f32 %v1499, %v1612
        %v1629 = vadd.f32 %v1500, %v1613
        %v1630 = vadd.f32 %v1501, %v1614
        %v1631 = vadd.f32 %v1502, %v1615
        %v1632 = vadd.f32 %v1503, %v1616
        %v1633 = vadd.f32 %v1504, %v1617
        %v1634 = vadd.f32 %v1505, %v1618
        %v1635 = vadd.f32 %v1506, %v1619
        %v1636 = vsel %vm1051, 1, 0
        %v1637 = vsel %vm1052, 1, 0
        %v1638 = vsel %vm1053, 1, 0
        %v1639 = vsel %vm1054, 1, 0
        %v1640 = vsel %vm1055, 1, 0
        %v1641 = vsel %vm1056, 1, 0
        %v1642 = vsel %vm1057, 1, 0
        %v1643 = vsel %vm1058, 1, 0
        %v1644 = vsel %vm1059, 1, 0
        %v1645 = vsel %vm1060, 1, 0
        %v1646 = vsel %vm1061, 1, 0
        %v1647 = vsel %vm1062, 1, 0
        %v1648 = vsel %vm1063, 1, 0
        %v1649 = vsel %vm1064, 1, 0
        %v1650 = vsel %vm1065, 1, 0
        %v1651 = vsel %vm1066, 1, 0
        %vm1652 = vcmp.eq.s32.totalorder %v1636, 1
        %vm1653 = vcmp.eq.s32.totalorder %v1637, 1
        %vm1654 = vcmp.eq.s32.totalorder %v1638, 1
        %vm1655 = vcmp.eq.s32.totalorder %v1639, 1
        %vm1656 = vcmp.eq.s32.totalorder %v1640, 1
        %vm1657 = vcmp.eq.s32.totalorder %v1641, 1
        %vm1658 = vcmp.eq.s32.totalorder %v1642, 1
        %vm1659 = vcmp.eq.s32.totalorder %v1643, 1
        %vm1660 = vcmp.eq.s32.totalorder %v1644, 1
        %vm1661 = vcmp.eq.s32.totalorder %v1645, 1
        %vm1662 = vcmp.eq.s32.totalorder %v1646, 1
        %vm1663 = vcmp.eq.s32.totalorder %v1647, 1
        %vm1664 = vcmp.eq.s32.totalorder %v1648, 1
        %vm1665 = vcmp.eq.s32.totalorder %v1649, 1
        %vm1666 = vcmp.eq.s32.totalorder %v1650, 1
        %vm1667 = vcmp.eq.s32.totalorder %v1651, 1
        %v1668 = vsel %vm1652, %v1556, 0.0
        %v1669 = vsel %vm1653, %v1557, 0.0
        %v1670 = vsel %vm1654, %v1558, 0.0
        %v1671 = vsel %vm1655, %v1559, 0.0
        %v1672 = vsel %vm1656, %v1560, 0.0
        %v1673 = vsel %vm1657, %v1561, 0.0
        %v1674 = vsel %vm1658, %v1562, 0.0
        %v1675 = vsel %vm1659, %v1563, 0.0
        %v1676 = vsel %vm1660, %v1564, 0.0
        %v1677 = vsel %vm1661, %v1565, 0.0
        %v1678 = vsel %vm1662, %v1566, 0.0
        %v1679 = vsel %vm1663, %v1567, 0.0
        %v1680 = vsel %vm1664, %v1568, 0.0
        %v1681 = vsel %vm1665, %v1569, 0.0
        %v1682 = vsel %vm1666, %v1570, 0.0
        %v1683 = vsel %vm1667, %v1571, 0.0
        %v1684 = vadd.f32 %v1620, %v1668
        %v1685 = vadd.f32 %v1621, %v1669
        %v1686 = vadd.f32 %v1622, %v1670
        %v1687 = vadd.f32 %v1623, %v1671
        %v1688 = vadd.f32 %v1624, %v1672
        %v1689 = vadd.f32 %v1625, %v1673
        %v1690 = vadd.f32 %v1626, %v1674
        %v1691 = vadd.f32 %v1627, %v1675
        %v1692 = vadd.f32 %v1628, %v1676
        %v1693 = vadd.f32 %v1629, %v1677
        %v1694 = vadd.f32 %v1630, %v1678
        %v1695 = vadd.f32 %v1631, %v1679
        %v1696 = vadd.f32 %v1632, %v1680
        %v1697 = vadd.f32 %v1633, %v1681
        %v1698 = vadd.f32 %v1634, %v1682
        %v1699 = vadd.f32 %v1635, %v1683
        %v1701 = vperm.slane %v808, 0
        %v1703 = vadd.f32 %v1684, %v1701
        %v1704 = vadd.f32 %v1685, %v1701
        %v1705 = vadd.f32 %v1686, %v1701
        %v1706 = vadd.f32 %v1687, %v1701
        %v1707 = vadd.f32 %v1688, %v1701
        %v1708 = vadd.f32 %v1689, %v1701
        %v1709 = vadd.f32 %v1690, %v1701
        %v1710 = vadd.f32 %v1691, %v1701
        %v1711 = vadd.f32 %v1692, %v1701
        %v1712 = vadd.f32 %v1693, %v1701
        %v1713 = vadd.f32 %v1694, %v1701
        %v1714 = vadd.f32 %v1695, %v1701
        %v1715 = vadd.f32 %v1696, %v1701
        %v1716 = vadd.f32 %v1697, %v1701
        %v1717 = vadd.f32 %v1698, %v1701
        %v1718 = vadd.f32 %v1699, %v1701
        %v1719 = vmul.f32 %v1703, 0.5
        %v1720 = vmul.f32 %v1704, 0.5
        %v1721 = vmul.f32 %v1705, 0.5
        %v1722 = vmul.f32 %v1706, 0.5
        %v1723 = vmul.f32 %v1707, 0.5
        %v1724 = vmul.f32 %v1708, 0.5
        %v1725 = vmul.f32 %v1709, 0.5
        %v1726 = vmul.f32 %v1710, 0.5
        %v1727 = vmul.f32 %v1711, 0.5
        %v1728 = vmul.f32 %v1712, 0.5
        %v1729 = vmul.f32 %v1713, 0.5
        %v1730 = vmul.f32 %v1714, 0.5
        %v1731 = vmul.f32 %v1715, 0.5
        %v1732 = vmul.f32 %v1716, 0.5
        %v1733 = vmul.f32 %v1717, 0.5
        %v1734 = vmul.f32 %v1718, 0.5
        %v1735 = vmul.f32 %v1703, 0.70710677
        %v1736 = vmul.f32 %v1704, 0.70710677
        %v1737 = vmul.f32 %v1705, 0.70710677
        %v1738 = vmul.f32 %v1706, 0.70710677
        %v1739 = vmul.f32 %v1707, 0.70710677
        %v1740 = vmul.f32 %v1708, 0.70710677
        %v1741 = vmul.f32 %v1709, 0.70710677
        %v1742 = vmul.f32 %v1710, 0.70710677
        %v1743 = vmul.f32 %v1711, 0.70710677
        %v1744 = vmul.f32 %v1712, 0.70710677
        %v1745 = vmul.f32 %v1713, 0.70710677
        %v1746 = vmul.f32 %v1714, 0.70710677
        %v1747 = vmul.f32 %v1715, 0.70710677
        %v1748 = vmul.f32 %v1716, 0.70710677
        %v1749 = vmul.f32 %v1717, 0.70710677
        %v1750 = vmul.f32 %v1718, 0.70710677
        %v1751 = vmul.f32 %v1735, %v1735
        %v1752 = vmin.f32 16.0, %v1751
        %v1753 = vmul.f32 %v1752, 2.1237322e-06
        %v1754 = vadd.f32 %v1753, 0.00028619796
        %v1755 = vmul.f32 %v1752, %v1754
        %v1756 = vadd.f32 %v1755, 0.0036580483
        %v1757 = vmul.f32 %v1752, %v1756
        %v1758 = vadd.f32 %v1757, 0.05243302
        %v1759 = vmul.f32 %v1752, %v1758
        %v1760 = vadd.f32 %v1759, 0.18741608
        %v1761 = vmul.f32 %v1752, %v1760
        %v1762 = vadd.f32 %v1761, 1.1283791
        %v1763 = vmul.f32 %v1735, %v1762
        %v1764 = vmul.f32 %v1752, 3.8918573e-05
        %v1765 = vadd.f32 %v1764, 0.001143296
        %v1766 = vmul.f32 %v1752, %v1765
        %v1767 = vadd.f32 %v1766, 0.014752088
        %v1768 = vmul.f32 %v1752, %v1767
        %v1769 = vadd.f32 %v1768, 0.112945676
        %v1770 = vmul.f32 %v1752, %v1769
        %v1771 = vadd.f32 %v1770, 0.4994258
        %v1772 = vmul.f32 %v1752, %v1771
        %v1773 = vadd.f32 %v1772, 1.0
        %v1774 = vrcp.pop %v1773
        %v1775 = vmul.f32 %v1773, %v1774
        %v1776 = vsub.f32 1.0, %v1775
        %v1777 = vmul.f32 %v1774, %v1776
        %v1778 = vadd.f32 %v1774, %v1777
        %vm1779 = vweird.f32 %v1773
        %vm1780 = vweird.f32 %v1774
        %vm1781 = vmor %vm1779, %vm1780
        %v1782 = vsel %vm1781, %v1774, %v1778
        %v1783 = vand.u32 2147483647, %v1773
        %vm1784 = vcmp.eq.f32.partialorder %v1783, 8.507059e+37
        %v1785 = vand.u32 %v1773, 2147483648
        %v1786 = vor.u32 1.1754944e-38, %v1785
        %v1787 = vsel %vm1784, %v1786, %v1782
        %v1788 = vmul.f32 %v1763, %v1787
        %v1789 = vmin.f32 %v1788, 1.0
        %v1790 = vmax.f32 %v1789, -1.0
        %v1791 = vmul.f32 %v1736, %v1736
        %v1792 = vmin.f32 16.0, %v1791
        %v1793 = vmul.f32 %v1792, 2.1237322e-06
        %v1794 = vadd.f32 %v1793, 0.00028619796
        %v1795 = vmul.f32 %v1792, %v1794
        %v1796 = vadd.f32 %v1795, 0.0036580483
        %v1797 = vmul.f32 %v1792, %v1796
        %v1798 = vadd.f32 %v1797, 0.05243302
        %v1799 = vmul.f32 %v1792, %v1798
        %v1800 = vadd.f32 %v1799, 0.18741608
        %v1801 = vmul.f32 %v1792, %v1800
        %v1802 = vadd.f32 %v1801, 1.1283791
        %v1803 = vmul.f32 %v1736, %v1802
        %v1804 = vmul.f32 %v1792, 3.8918573e-05
        %v1805 = vadd.f32 %v1804, 0.001143296
        %v1806 = vmul.f32 %v1792, %v1805
        %v1807 = vadd.f32 %v1806, 0.014752088
        %v1808 = vmul.f32 %v1792, %v1807
        %v1809 = vadd.f32 %v1808, 0.112945676
        %v1810 = vmul.f32 %v1792, %v1809
        %v1811 = vadd.f32 %v1810, 0.4994258
        %v1812 = vmul.f32 %v1792, %v1811
        %v1813 = vadd.f32 %v1812, 1.0
        %v1814 = vrcp.pop %v1813
        %v1815 = vmul.f32 %v1813, %v1814
        %v1816 = vsub.f32 1.0, %v1815
        %v1817 = vmul.f32 %v1814, %v1816
        %v1818 = vadd.f32 %v1814, %v1817
        %vm1819 = vweird.f32 %v1813
        %vm1820 = vweird.f32 %v1814
        %vm1821 = vmor %vm1819, %vm1820
        %v1822 = vsel %vm1821, %v1814, %v1818
        %v1823 = vand.u32 2147483647, %v1813
        %vm1824 = vcmp.eq.f32.partialorder %v1823, 8.507059e+37
        %v1825 = vand.u32 %v1813, 2147483648
        %v1826 = vor.u32 1.1754944e-38, %v1825
        %v1827 = vsel %vm1824, %v1826, %v1822
        %v1828 = vmul.f32 %v1803, %v1827
        %v1829 = vmin.f32 %v1828, 1.0
        %v1830 = vmax.f32 %v1829, -1.0
        %v1831 = vmul.f32 %v1737, %v1737
        %v1832 = vmin.f32 16.0, %v1831
        %v1833 = vmul.f32 %v1832, 2.1237322e-06
        %v1834 = vadd.f32 %v1833, 0.00028619796
        %v1835 = vmul.f32 %v1832, %v1834
        %v1836 = vadd.f32 %v1835, 0.0036580483
        %v1837 = vmul.f32 %v1832, %v1836
        %v1838 = vadd.f32 %v1837, 0.05243302
        %v1839 = vmul.f32 %v1832, %v1838
        %v1840 = vadd.f32 %v1839, 0.18741608
        %v1841 = vmul.f32 %v1832, %v1840
        %v1842 = vadd.f32 %v1841, 1.1283791
        %v1843 = vmul.f32 %v1737, %v1842
        %v1844 = vmul.f32 %v1832, 3.8918573e-05
        %v1845 = vadd.f32 %v1844, 0.001143296
        %v1846 = vmul.f32 %v1832, %v1845
        %v1847 = vadd.f32 %v1846, 0.014752088
        %v1848 = vmul.f32 %v1832, %v1847
        %v1849 = vadd.f32 %v1848, 0.112945676
        %v1850 = vmul.f32 %v1832, %v1849
        %v1851 = vadd.f32 %v1850, 0.4994258
        %v1852 = vmul.f32 %v1832, %v1851
        %v1853 = vadd.f32 %v1852, 1.0
        %v1854 = vrcp.pop %v1853
        %v1855 = vmul.f32 %v1853, %v1854
        %v1856 = vsub.f32 1.0, %v1855
        %v1857 = vmul.f32 %v1854, %v1856
        %v1858 = vadd.f32 %v1854, %v1857
        %vm1859 = vweird.f32 %v1853
        %vm1860 = vweird.f32 %v1854
        %vm1861 = vmor %vm1859, %vm1860
        %v1862 = vsel %vm1861, %v1854, %v1858
        %v1863 = vand.u32 2147483647, %v1853
        %vm1864 = vcmp.eq.f32.partialorder %v1863, 8.507059e+37
        %v1865 = vand.u32 %v1853, 2147483648
        %v1866 = vor.u32 1.1754944e-38, %v1865
        %v1867 = vsel %vm1864, %v1866, %v1862
        %v1868 = vmul.f32 %v1843, %v1867
        %v1869 = vmin.f32 %v1868, 1.0
        %v1870 = vmax.f32 %v1869, -1.0
        %v1871 = vmul.f32 %v1738, %v1738
        %v1872 = vmin.f32 16.0, %v1871
        %v1873 = vmul.f32 %v1872, 2.1237322e-06
        %v1874 = vadd.f32 %v1873, 0.00028619796
        %v1875 = vmul.f32 %v1872, %v1874
        %v1876 = vadd.f32 %v1875, 0.0036580483
        %v1877 = vmul.f32 %v1872, %v1876
        %v1878 = vadd.f32 %v1877, 0.05243302
        %v1879 = vmul.f32 %v1872, %v1878
        %v1880 = vadd.f32 %v1879, 0.18741608
        %v1881 = vmul.f32 %v1872, %v1880
        %v1882 = vadd.f32 %v1881, 1.1283791
        %v1883 = vmul.f32 %v1738, %v1882
        %v1884 = vmul.f32 %v1872, 3.8918573e-05
        %v1885 = vadd.f32 %v1884, 0.001143296
        %v1886 = vmul.f32 %v1872, %v1885
        %v1887 = vadd.f32 %v1886, 0.014752088
        %v1888 = vmul.f32 %v1872, %v1887
        %v1889 = vadd.f32 %v1888, 0.112945676
        %v1890 = vmul.f32 %v1872, %v1889
        %v1891 = vadd.f32 %v1890, 0.4994258
        %v1892 = vmul.f32 %v1872, %v1891
        %v1893 = vadd.f32 %v1892, 1.0
        %v1894 = vrcp.pop %v1893
        %v1895 = vmul.f32 %v1893, %v1894
        %v1896 = vsub.f32 1.0, %v1895
        %v1897 = vmul.f32 %v1894, %v1896
        %v1898 = vadd.f32 %v1894, %v1897
        %vm1899 = vweird.f32 %v1893
        %vm1900 = vweird.f32 %v1894
        %vm1901 = vmor %vm1899, %vm1900
        %v1902 = vsel %vm1901, %v1894, %v1898
        %v1903 = vand.u32 2147483647, %v1893
        %vm1904 = vcmp.eq.f32.partialorder %v1903, 8.507059e+37
        %v1905 = vand.u32 %v1893, 2147483648
        %v1906 = vor.u32 1.1754944e-38, %v1905
        %v1907 = vsel %vm1904, %v1906, %v1902
        %v1908 = vmul.f32 %v1883, %v1907
        %v1909 = vmin.f32 %v1908, 1.0
        %v1910 = vmax.f32 %v1909, -1.0
        %v1911 = vmul.f32 %v1739, %v1739
        %v1912 = vmin.f32 16.0, %v1911
        %v1913 = vmul.f32 %v1912, 2.1237322e-06
        %v1914 = vadd.f32 %v1913, 0.00028619796
        %v1915 = vmul.f32 %v1912, %v1914
        %v1916 = vadd.f32 %v1915, 0.0036580483
        %v1917 = vmul.f32 %v1912, %v1916
        %v1918 = vadd.f32 %v1917, 0.05243302
        %v1919 = vmul.f32 %v1912, %v1918
        %v1920 = vadd.f32 %v1919, 0.18741608
        %v1921 = vmul.f32 %v1912, %v1920
        %v1922 = vadd.f32 %v1921, 1.1283791
        %v1923 = vmul.f32 %v1739, %v1922
        %v1924 = vmul.f32 %v1912, 3.8918573e-05
        %v1925 = vadd.f32 %v1924, 0.001143296
        %v1926 = vmul.f32 %v1912, %v1925
        %v1927 = vadd.f32 %v1926, 0.014752088
        %v1928 = vmul.f32 %v1912, %v1927
        %v1929 = vadd.f32 %v1928, 0.112945676
        %v1930 = vmul.f32 %v1912, %v1929
        %v1931 = vadd.f32 %v1930, 0.4994258
        %v1932 = vmul.f32 %v1912, %v1931
        %v1933 = vadd.f32 %v1932, 1.0
        %v1934 = vrcp.pop %v1933
        %v1935 = vmul.f32 %v1933, %v1934
        %v1936 = vsub.f32 1.0, %v1935
        %v1937 = vmul.f32 %v1934, %v1936
        %v1938 = vadd.f32 %v1934, %v1937
        %vm1939 = vweird.f32 %v1933
        %vm1940 = vweird.f32 %v1934
        %vm1941 = vmor %vm1939, %vm1940
        %v1942 = vsel %vm1941, %v1934, %v1938
        %v1943 = vand.u32 2147483647, %v1933
        %vm1944 = vcmp.eq.f32.partialorder %v1943, 8.507059e+37
        %v1945 = vand.u32 %v1933, 2147483648
        %v1946 = vor.u32 1.1754944e-38, %v1945
        %v1947 = vsel %vm1944, %v1946, %v1942
        %v1948 = vmul.f32 %v1923, %v1947
        %v1949 = vmin.f32 %v1948, 1.0
        %v1950 = vmax.f32 %v1949, -1.0
        %v1951 = vmul.f32 %v1740, %v1740
        %v1952 = vmin.f32 16.0, %v1951
        %v1953 = vmul.f32 %v1952, 2.1237322e-06
        %v1954 = vadd.f32 %v1953, 0.00028619796
        %v1955 = vmul.f32 %v1952, %v1954
        %v1956 = vadd.f32 %v1955, 0.0036580483
        %v1957 = vmul.f32 %v1952, %v1956
        %v1958 = vadd.f32 %v1957, 0.05243302
        %v1959 = vmul.f32 %v1952, %v1958
        %v1960 = vadd.f32 %v1959, 0.18741608
        %v1961 = vmul.f32 %v1952, %v1960
        %v1962 = vadd.f32 %v1961, 1.1283791
        %v1963 = vmul.f32 %v1740, %v1962
        %v1964 = vmul.f32 %v1952, 3.8918573e-05
        %v1965 = vadd.f32 %v1964, 0.001143296
        %v1966 = vmul.f32 %v1952, %v1965
        %v1967 = vadd.f32 %v1966, 0.014752088
        %v1968 = vmul.f32 %v1952, %v1967
        %v1969 = vadd.f32 %v1968, 0.112945676
        %v1970 = vmul.f32 %v1952, %v1969
        %v1971 = vadd.f32 %v1970, 0.4994258
        %v1972 = vmul.f32 %v1952, %v1971
        %v1973 = vadd.f32 %v1972, 1.0
        %v1974 = vrcp.pop %v1973
        %v1975 = vmul.f32 %v1973, %v1974
        %v1976 = vsub.f32 1.0, %v1975
        %v1977 = vmul.f32 %v1974, %v1976
        %v1978 = vadd.f32 %v1974, %v1977
        %vm1979 = vweird.f32 %v1973
        %vm1980 = vweird.f32 %v1974
        %vm1981 = vmor %vm1979, %vm1980
        %v1982 = vsel %vm1981, %v1974, %v1978
        %v1983 = vand.u32 2147483647, %v1973
        %vm1984 = vcmp.eq.f32.partialorder %v1983, 8.507059e+37
        %v1985 = vand.u32 %v1973, 2147483648
        %v1986 = vor.u32 1.1754944e-38, %v1985
        %v1987 = vsel %vm1984, %v1986, %v1982
        %v1988 = vmul.f32 %v1963, %v1987
        %v1989 = vmin.f32 %v1988, 1.0
        %v1990 = vmax.f32 %v1989, -1.0
        %v1991 = vmul.f32 %v1741, %v1741
        %v1992 = vmin.f32 16.0, %v1991
        %v1993 = vmul.f32 %v1992, 2.1237322e-06
        %v1994 = vadd.f32 %v1993, 0.00028619796
        %v1995 = vmul.f32 %v1992, %v1994
        %v1996 = vadd.f32 %v1995, 0.0036580483
        %v1997 = vmul.f32 %v1992, %v1996
        %v1998 = vadd.f32 %v1997, 0.05243302
        %v1999 = vmul.f32 %v1992, %v1998
        %v2000 = vadd.f32 %v1999, 0.18741608
        %v2001 = vmul.f32 %v1992, %v2000
        %v2002 = vadd.f32 %v2001, 1.1283791
        %v2003 = vmul.f32 %v1741, %v2002
        %v2004 = vmul.f32 %v1992, 3.8918573e-05
        %v2005 = vadd.f32 %v2004, 0.001143296
        %v2006 = vmul.f32 %v1992, %v2005
        %v2007 = vadd.f32 %v2006, 0.014752088
        %v2008 = vmul.f32 %v1992, %v2007
        %v2009 = vadd.f32 %v2008, 0.112945676
        %v2010 = vmul.f32 %v1992, %v2009
        %v2011 = vadd.f32 %v2010, 0.4994258
        %v2012 = vmul.f32 %v1992, %v2011
        %v2013 = vadd.f32 %v2012, 1.0
        %v2014 = vrcp.pop %v2013
        %v2015 = vmul.f32 %v2013, %v2014
        %v2016 = vsub.f32 1.0, %v2015
        %v2017 = vmul.f32 %v2014, %v2016
        %v2018 = vadd.f32 %v2014, %v2017
        %vm2019 = vweird.f32 %v2013
        %vm2020 = vweird.f32 %v2014
        %vm2021 = vmor %vm2019, %vm2020
        %v2022 = vsel %vm2021, %v2014, %v2018
        %v2023 = vand.u32 2147483647, %v2013
        %vm2024 = vcmp.eq.f32.partialorder %v2023, 8.507059e+37
        %v2025 = vand.u32 %v2013, 2147483648
        %v2026 = vor.u32 1.1754944e-38, %v2025
        %v2027 = vsel %vm2024, %v2026, %v2022
        %v2028 = vmul.f32 %v2003, %v2027
        %v2029 = vmin.f32 %v2028, 1.0
        %v2030 = vmax.f32 %v2029, -1.0
        %v2031 = vmul.f32 %v1742, %v1742
        %v2032 = vmin.f32 16.0, %v2031
        %v2033 = vmul.f32 %v2032, 2.1237322e-06
        %v2034 = vadd.f32 %v2033, 0.00028619796
        %v2035 = vmul.f32 %v2032, %v2034
        %v2036 = vadd.f32 %v2035, 0.0036580483
        %v2037 = vmul.f32 %v2032, %v2036
        %v2038 = vadd.f32 %v2037, 0.05243302
        %v2039 = vmul.f32 %v2032, %v2038
        %v2040 = vadd.f32 %v2039, 0.18741608
        %v2041 = vmul.f32 %v2032, %v2040
        %v2042 = vadd.f32 %v2041, 1.1283791
        %v2043 = vmul.f32 %v1742, %v2042
        %v2044 = vmul.f32 %v2032, 3.8918573e-05
        %v2045 = vadd.f32 %v2044, 0.001143296
        %v2046 = vmul.f32 %v2032, %v2045
        %v2047 = vadd.f32 %v2046, 0.014752088
        %v2048 = vmul.f32 %v2032, %v2047
        %v2049 = vadd.f32 %v2048, 0.112945676
        %v2050 = vmul.f32 %v2032, %v2049
        %v2051 = vadd.f32 %v2050, 0.4994258
        %v2052 = vmul.f32 %v2032, %v2051
        %v2053 = vadd.f32 %v2052, 1.0
        %v2054 = vrcp.pop %v2053
        %v2055 = vmul.f32 %v2053, %v2054
        %v2056 = vsub.f32 1.0, %v2055
        %v2057 = vmul.f32 %v2054, %v2056
        %v2058 = vadd.f32 %v2054, %v2057
        %vm2059 = vweird.f32 %v2053
        %vm2060 = vweird.f32 %v2054
        %vm2061 = vmor %vm2059, %vm2060
        %v2062 = vsel %vm2061, %v2054, %v2058
        %v2063 = vand.u32 2147483647, %v2053
        %vm2064 = vcmp.eq.f32.partialorder %v2063, 8.507059e+37
        %v2065 = vand.u32 %v2053, 2147483648
        %v2066 = vor.u32 1.1754944e-38, %v2065
        %v2067 = vsel %vm2064, %v2066, %v2062
        %v2068 = vmul.f32 %v2043, %v2067
        %v2069 = vmin.f32 %v2068, 1.0
        %v2070 = vmax.f32 %v2069, -1.0
        %v2071 = vmul.f32 %v1743, %v1743
        %v2072 = vmin.f32 16.0, %v2071
        %v2073 = vmul.f32 %v2072, 2.1237322e-06
        %v2074 = vadd.f32 %v2073, 0.00028619796
        %v2075 = vmul.f32 %v2072, %v2074
        %v2076 = vadd.f32 %v2075, 0.0036580483
        %v2077 = vmul.f32 %v2072, %v2076
        %v2078 = vadd.f32 %v2077, 0.05243302
        %v2079 = vmul.f32 %v2072, %v2078
        %v2080 = vadd.f32 %v2079, 0.18741608
        %v2081 = vmul.f32 %v2072, %v2080
        %v2082 = vadd.f32 %v2081, 1.1283791
        %v2083 = vmul.f32 %v1743, %v2082
        %v2084 = vmul.f32 %v2072, 3.8918573e-05
        %v2085 = vadd.f32 %v2084, 0.001143296
        %v2086 = vmul.f32 %v2072, %v2085
        %v2087 = vadd.f32 %v2086, 0.014752088
        %v2088 = vmul.f32 %v2072, %v2087
        %v2089 = vadd.f32 %v2088, 0.112945676
        %v2090 = vmul.f32 %v2072, %v2089
        %v2091 = vadd.f32 %v2090, 0.4994258
        %v2092 = vmul.f32 %v2072, %v2091
        %v2093 = vadd.f32 %v2092, 1.0
        %v2094 = vrcp.pop %v2093
        %v2095 = vmul.f32 %v2093, %v2094
        %v2096 = vsub.f32 1.0, %v2095
        %v2097 = vmul.f32 %v2094, %v2096
        %v2098 = vadd.f32 %v2094, %v2097
        %vm2099 = vweird.f32 %v2093
        %vm2100 = vweird.f32 %v2094
        %vm2101 = vmor %vm2099, %vm2100
        %v2102 = vsel %vm2101, %v2094, %v2098
        %v2103 = vand.u32 2147483647, %v2093
        %vm2104 = vcmp.eq.f32.partialorder %v2103, 8.507059e+37
        %v2105 = vand.u32 %v2093, 2147483648
        %v2106 = vor.u32 1.1754944e-38, %v2105
        %v2107 = vsel %vm2104, %v2106, %v2102
        %v2108 = vmul.f32 %v2083, %v2107
        %v2109 = vmin.f32 %v2108, 1.0
        %v2110 = vmax.f32 %v2109, -1.0
        %v2111 = vmul.f32 %v1744, %v1744
        %v2112 = vmin.f32 16.0, %v2111
        %v2113 = vmul.f32 %v2112, 2.1237322e-06
        %v2114 = vadd.f32 %v2113, 0.00028619796
        %v2115 = vmul.f32 %v2112, %v2114
        %v2116 = vadd.f32 %v2115, 0.0036580483
        %v2117 = vmul.f32 %v2112, %v2116
        %v2118 = vadd.f32 %v2117, 0.05243302
        %v2119 = vmul.f32 %v2112, %v2118
        %v2120 = vadd.f32 %v2119, 0.18741608
        %v2121 = vmul.f32 %v2112, %v2120
        %v2122 = vadd.f32 %v2121, 1.1283791
        %v2123 = vmul.f32 %v1744, %v2122
        %v2124 = vmul.f32 %v2112, 3.8918573e-05
        %v2125 = vadd.f32 %v2124, 0.001143296
        %v2126 = vmul.f32 %v2112, %v2125
        %v2127 = vadd.f32 %v2126, 0.014752088
        %v2128 = vmul.f32 %v2112, %v2127
        %v2129 = vadd.f32 %v2128, 0.112945676
        %v2130 = vmul.f32 %v2112, %v2129
        %v2131 = vadd.f32 %v2130, 0.4994258
        %v2132 = vmul.f32 %v2112, %v2131
        %v2133 = vadd.f32 %v2132, 1.0
        %v2134 = vrcp.pop %v2133
        %v2135 = vmul.f32 %v2133, %v2134
        %v2136 = vsub.f32 1.0, %v2135
        %v2137 = vmul.f32 %v2134, %v2136
        %v2138 = vadd.f32 %v2134, %v2137
        %vm2139 = vweird.f32 %v2133
        %vm2140 = vweird.f32 %v2134
        %vm2141 = vmor %vm2139, %vm2140
        %v2142 = vsel %vm2141, %v2134, %v2138
        %v2143 = vand.u32 2147483647, %v2133
        %vm2144 = vcmp.eq.f32.partialorder %v2143, 8.507059e+37
        %v2145 = vand.u32 %v2133, 2147483648
        %v2146 = vor.u32 1.1754944e-38, %v2145
        %v2147 = vsel %vm2144, %v2146, %v2142
        %v2148 = vmul.f32 %v2123, %v2147
        %v2149 = vmin.f32 %v2148, 1.0
        %v2150 = vmax.f32 %v2149, -1.0
        %v2151 = vmul.f32 %v1745, %v1745
        %v2152 = vmin.f32 16.0, %v2151
        %v2153 = vmul.f32 %v2152, 2.1237322e-06
        %v2154 = vadd.f32 %v2153, 0.00028619796
        %v2155 = vmul.f32 %v2152, %v2154
        %v2156 = vadd.f32 %v2155, 0.0036580483
        %v2157 = vmul.f32 %v2152, %v2156
        %v2158 = vadd.f32 %v2157, 0.05243302
        %v2159 = vmul.f32 %v2152, %v2158
        %v2160 = vadd.f32 %v2159, 0.18741608
        %v2161 = vmul.f32 %v2152, %v2160
        %v2162 = vadd.f32 %v2161, 1.1283791
        %v2163 = vmul.f32 %v1745, %v2162
        %v2164 = vmul.f32 %v2152, 3.8918573e-05
        %v2165 = vadd.f32 %v2164, 0.001143296
        %v2166 = vmul.f32 %v2152, %v2165
        %v2167 = vadd.f32 %v2166, 0.014752088
        %v2168 = vmul.f32 %v2152, %v2167
        %v2169 = vadd.f32 %v2168, 0.112945676
        %v2170 = vmul.f32 %v2152, %v2169
        %v2171 = vadd.f32 %v2170, 0.4994258
        %v2172 = vmul.f32 %v2152, %v2171
        %v2173 = vadd.f32 %v2172, 1.0
        %v2174 = vrcp.pop %v2173
        %v2175 = vmul.f32 %v2173, %v2174
        %v2176 = vsub.f32 1.0, %v2175
        %v2177 = vmul.f32 %v2174, %v2176
        %v2178 = vadd.f32 %v2174, %v2177
        %vm2179 = vweird.f32 %v2173
        %vm2180 = vweird.f32 %v2174
        %vm2181 = vmor %vm2179, %vm2180
        %v2182 = vsel %vm2181, %v2174, %v2178
        %v2183 = vand.u32 2147483647, %v2173
        %vm2184 = vcmp.eq.f32.partialorder %v2183, 8.507059e+37
        %v2185 = vand.u32 %v2173, 2147483648
        %v2186 = vor.u32 1.1754944e-38, %v2185
        %v2187 = vsel %vm2184, %v2186, %v2182
        %v2188 = vmul.f32 %v2163, %v2187
        %v2189 = vmin.f32 %v2188, 1.0
        %v2190 = vmax.f32 %v2189, -1.0
        %v2191 = vmul.f32 %v1746, %v1746
        %v2192 = vmin.f32 16.0, %v2191
        %v2193 = vmul.f32 %v2192, 2.1237322e-06
        %v2194 = vadd.f32 %v2193, 0.00028619796
        %v2195 = vmul.f32 %v2192, %v2194
        %v2196 = vadd.f32 %v2195, 0.0036580483
        %v2197 = vmul.f32 %v2192, %v2196
        %v2198 = vadd.f32 %v2197, 0.05243302
        %v2199 = vmul.f32 %v2192, %v2198
        %v2200 = vadd.f32 %v2199, 0.18741608
        %v2201 = vmul.f32 %v2192, %v2200
        %v2202 = vadd.f32 %v2201, 1.1283791
        %v2203 = vmul.f32 %v1746, %v2202
        %v2204 = vmul.f32 %v2192, 3.8918573e-05
        %v2205 = vadd.f32 %v2204, 0.001143296
        %v2206 = vmul.f32 %v2192, %v2205
        %v2207 = vadd.f32 %v2206, 0.014752088
        %v2208 = vmul.f32 %v2192, %v2207
        %v2209 = vadd.f32 %v2208, 0.112945676
        %v2210 = vmul.f32 %v2192, %v2209
        %v2211 = vadd.f32 %v2210, 0.4994258
        %v2212 = vmul.f32 %v2192, %v2211
        %v2213 = vadd.f32 %v2212, 1.0
        %v2214 = vrcp.pop %v2213
        %v2215 = vmul.f32 %v2213, %v2214
        %v2216 = vsub.f32 1.0, %v2215
        %v2217 = vmul.f32 %v2214, %v2216
        %v2218 = vadd.f32 %v2214, %v2217
        %vm2219 = vweird.f32 %v2213
        %vm2220 = vweird.f32 %v2214
        %vm2221 = vmor %vm2219, %vm2220
        %v2222 = vsel %vm2221, %v2214, %v2218
        %v2223 = vand.u32 2147483647, %v2213
        %vm2224 = vcmp.eq.f32.partialorder %v2223, 8.507059e+37
        %v2225 = vand.u32 %v2213, 2147483648
        %v2226 = vor.u32 1.1754944e-38, %v2225
        %v2227 = vsel %vm2224, %v2226, %v2222
        %v2228 = vmul.f32 %v2203, %v2227
        %v2229 = vmin.f32 %v2228, 1.0
        %v2230 = vmax.f32 %v2229, -1.0
        %v2231 = vmul.f32 %v1747, %v1747
        %v2232 = vmin.f32 16.0, %v2231
        %v2233 = vmul.f32 %v2232, 2.1237322e-06
        %v2234 = vadd.f32 %v2233, 0.00028619796
        %v2235 = vmul.f32 %v2232, %v2234
        %v2236 = vadd.f32 %v2235, 0.0036580483
        %v2237 = vmul.f32 %v2232, %v2236
        %v2238 = vadd.f32 %v2237, 0.05243302
        %v2239 = vmul.f32 %v2232, %v2238
        %v2240 = vadd.f32 %v2239, 0.18741608
        %v2241 = vmul.f32 %v2232, %v2240
        %v2242 = vadd.f32 %v2241, 1.1283791
        %v2243 = vmul.f32 %v1747, %v2242
        %v2244 = vmul.f32 %v2232, 3.8918573e-05
        %v2245 = vadd.f32 %v2244, 0.001143296
        %v2246 = vmul.f32 %v2232, %v2245
        %v2247 = vadd.f32 %v2246, 0.014752088
        %v2248 = vmul.f32 %v2232, %v2247
        %v2249 = vadd.f32 %v2248, 0.112945676
        %v2250 = vmul.f32 %v2232, %v2249
        %v2251 = vadd.f32 %v2250, 0.4994258
        %v2252 = vmul.f32 %v2232, %v2251
        %v2253 = vadd.f32 %v2252, 1.0
        %v2254 = vrcp.pop %v2253
        %v2255 = vmul.f32 %v2253, %v2254
        %v2256 = vsub.f32 1.0, %v2255
        %v2257 = vmul.f32 %v2254, %v2256
        %v2258 = vadd.f32 %v2254, %v2257
        %vm2259 = vweird.f32 %v2253
        %vm2260 = vweird.f32 %v2254
        %vm2261 = vmor %vm2259, %vm2260
        %v2262 = vsel %vm2261, %v2254, %v2258
        %v2263 = vand.u32 2147483647, %v2253
        %vm2264 = vcmp.eq.f32.partialorder %v2263, 8.507059e+37
        %v2265 = vand.u32 %v2253, 2147483648
        %v2266 = vor.u32 1.1754944e-38, %v2265
        %v2267 = vsel %vm2264, %v2266, %v2262
        %v2268 = vmul.f32 %v2243, %v2267
        %v2269 = vmin.f32 %v2268, 1.0
        %v2270 = vmax.f32 %v2269, -1.0
        %v2271 = vmul.f32 %v1748, %v1748
        %v2272 = vmin.f32 16.0, %v2271
        %v2273 = vmul.f32 %v2272, 2.1237322e-06
        %v2274 = vadd.f32 %v2273, 0.00028619796
        %v2275 = vmul.f32 %v2272, %v2274
        %v2276 = vadd.f32 %v2275, 0.0036580483
        %v2277 = vmul.f32 %v2272, %v2276
        %v2278 = vadd.f32 %v2277, 0.05243302
        %v2279 = vmul.f32 %v2272, %v2278
        %v2280 = vadd.f32 %v2279, 0.18741608
        %v2281 = vmul.f32 %v2272, %v2280
        %v2282 = vadd.f32 %v2281, 1.1283791
        %v2283 = vmul.f32 %v1748, %v2282
        %v2284 = vmul.f32 %v2272, 3.8918573e-05
        %v2285 = vadd.f32 %v2284, 0.001143296
        %v2286 = vmul.f32 %v2272, %v2285
        %v2287 = vadd.f32 %v2286, 0.014752088
        %v2288 = vmul.f32 %v2272, %v2287
        %v2289 = vadd.f32 %v2288, 0.112945676
        %v2290 = vmul.f32 %v2272, %v2289
        %v2291 = vadd.f32 %v2290, 0.4994258
        %v2292 = vmul.f32 %v2272, %v2291
        %v2293 = vadd.f32 %v2292, 1.0
        %v2294 = vrcp.pop %v2293
        %v2295 = vmul.f32 %v2293, %v2294
        %v2296 = vsub.f32 1.0, %v2295
        %v2297 = vmul.f32 %v2294, %v2296
        %v2298 = vadd.f32 %v2294, %v2297
        %vm2299 = vweird.f32 %v2293
        %vm2300 = vweird.f32 %v2294
        %vm2301 = vmor %vm2299, %vm2300
        %v2302 = vsel %vm2301, %v2294, %v2298
        %v2303 = vand.u32 2147483647, %v2293
        %vm2304 = vcmp.eq.f32.partialorder %v2303, 8.507059e+37
        %v2305 = vand.u32 %v2293, 2147483648
        %v2306 = vor.u32 1.1754944e-38, %v2305
        %v2307 = vsel %vm2304, %v2306, %v2302
        %v2308 = vmul.f32 %v2283, %v2307
        %v2309 = vmin.f32 %v2308, 1.0
        %v2310 = vmax.f32 %v2309, -1.0
        %v2311 = vmul.f32 %v1749, %v1749
        %v2312 = vmin.f32 16.0, %v2311
        %v2313 = vmul.f32 %v2312, 2.1237322e-06
        %v2314 = vadd.f32 %v2313, 0.00028619796
        %v2315 = vmul.f32 %v2312, %v2314
        %v2316 = vadd.f32 %v2315, 0.0036580483
        %v2317 = vmul.f32 %v2312, %v2316
        %v2318 = vadd.f32 %v2317, 0.05243302
        %v2319 = vmul.f32 %v2312, %v2318
        %v2320 = vadd.f32 %v2319, 0.18741608
        %v2321 = vmul.f32 %v2312, %v2320
        %v2322 = vadd.f32 %v2321, 1.1283791
        %v2323 = vmul.f32 %v1749, %v2322
        %v2324 = vmul.f32 %v2312, 3.8918573e-05
        %v2325 = vadd.f32 %v2324, 0.001143296
        %v2326 = vmul.f32 %v2312, %v2325
        %v2327 = vadd.f32 %v2326, 0.014752088
        %v2328 = vmul.f32 %v2312, %v2327
        %v2329 = vadd.f32 %v2328, 0.112945676
        %v2330 = vmul.f32 %v2312, %v2329
        %v2331 = vadd.f32 %v2330, 0.4994258
        %v2332 = vmul.f32 %v2312, %v2331
        %v2333 = vadd.f32 %v2332, 1.0
        %v2334 = vrcp.pop %v2333
        %v2335 = vmul.f32 %v2333, %v2334
        %v2336 = vsub.f32 1.0, %v2335
        %v2337 = vmul.f32 %v2334, %v2336
        %v2338 = vadd.f32 %v2334, %v2337
        %vm2339 = vweird.f32 %v2333
        %vm2340 = vweird.f32 %v2334
        %vm2341 = vmor %vm2339, %vm2340
        %v2342 = vsel %vm2341, %v2334, %v2338
        %v2343 = vand.u32 2147483647, %v2333
        %vm2344 = vcmp.eq.f32.partialorder %v2343, 8.507059e+37
        %v2345 = vand.u32 %v2333, 2147483648
        %v2346 = vor.u32 1.1754944e-38, %v2345
        %v2347 = vsel %vm2344, %v2346, %v2342
        %v2348 = vmul.f32 %v2323, %v2347
        %v2349 = vmin.f32 %v2348, 1.0
        %v2350 = vmax.f32 %v2349, -1.0
        %v2351 = vmul.f32 %v1750, %v1750
        %v2352 = vmin.f32 16.0, %v2351
        %v2353 = vmul.f32 %v2352, 2.1237322e-06
        %v2354 = vadd.f32 %v2353, 0.00028619796
        %v2355 = vmul.f32 %v2352, %v2354
        %v2356 = vadd.f32 %v2355, 0.0036580483
        %v2357 = vmul.f32 %v2352, %v2356
        %v2358 = vadd.f32 %v2357, 0.05243302
        %v2359 = vmul.f32 %v2352, %v2358
        %v2360 = vadd.f32 %v2359, 0.18741608
        %v2361 = vmul.f32 %v2352, %v2360
        %v2362 = vadd.f32 %v2361, 1.1283791
        %v2363 = vmul.f32 %v1750, %v2362
        %v2364 = vmul.f32 %v2352, 3.8918573e-05
        %v2365 = vadd.f32 %v2364, 0.001143296
        %v2366 = vmul.f32 %v2352, %v2365
        %v2367 = vadd.f32 %v2366, 0.014752088
        %v2368 = vmul.f32 %v2352, %v2367
        %v2369 = vadd.f32 %v2368, 0.112945676
        %v2370 = vmul.f32 %v2352, %v2369
        %v2371 = vadd.f32 %v2370, 0.4994258
        %v2372 = vmul.f32 %v2352, %v2371
        %v2373 = vadd.f32 %v2372, 1.0
        %v2374 = vrcp.pop %v2373
        %v2375 = vmul.f32 %v2373, %v2374
        %v2376 = vsub.f32 1.0, %v2375
        %v2377 = vmul.f32 %v2374, %v2376
        %v2378 = vadd.f32 %v2374, %v2377
        %vm2379 = vweird.f32 %v2373
        %vm2380 = vweird.f32 %v2374
        %vm2381 = vmor %vm2379, %vm2380
        %v2382 = vsel %vm2381, %v2374, %v2378
        %v2383 = vand.u32 2147483647, %v2373
        %vm2384 = vcmp.eq.f32.partialorder %v2383, 8.507059e+37
        %v2385 = vand.u32 %v2373, 2147483648
        %v2386 = vor.u32 1.1754944e-38, %v2385
        %v2387 = vsel %vm2384, %v2386, %v2382
        %v2388 = vmul.f32 %v2363, %v2387
        %v2389 = vmin.f32 %v2388, 1.0
        %v2390 = vmax.f32 %v2389, -1.0
        %v2391 = vadd.f32 %v1790, 1.0
        %v2392 = vadd.f32 %v1830, 1.0
        %v2393 = vadd.f32 %v1870, 1.0
        %v2394 = vadd.f32 %v1910, 1.0
        %v2395 = vadd.f32 %v1950, 1.0
        %v2396 = vadd.f32 %v1990, 1.0
        %v2397 = vadd.f32 %v2030, 1.0
        %v2398 = vadd.f32 %v2070, 1.0
        %v2399 = vadd.f32 %v2110, 1.0
        %v2400 = vadd.f32 %v2150, 1.0
        %v2401 = vadd.f32 %v2190, 1.0
        %v2402 = vadd.f32 %v2230, 1.0
        %v2403 = vadd.f32 %v2270, 1.0
        %v2404 = vadd.f32 %v2310, 1.0
        %v2405 = vadd.f32 %v2350, 1.0
        %v2406 = vadd.f32 %v2390, 1.0
        %v2407 = vmul.f32 %v1719, %v2391
        %v2408 = vmul.f32 %v1720, %v2392
        %v2409 = vmul.f32 %v1721, %v2393
        %v2410 = vmul.f32 %v1722, %v2394
        %v2411 = vmul.f32 %v1723, %v2395
        %v2412 = vmul.f32 %v1724, %v2396
        %v2413 = vmul.f32 %v1725, %v2397
        %v2414 = vmul.f32 %v1726, %v2398
        %v2415 = vmul.f32 %v1727, %v2399
        %v2416 = vmul.f32 %v1728, %v2400
        %v2417 = vmul.f32 %v1729, %v2401
        %v2418 = vmul.f32 %v1730, %v2402
        %v2419 = vmul.f32 %v1731, %v2403
        %v2420 = vmul.f32 %v1732, %v2404
        %v2421 = vmul.f32 %v1733, %v2405
        %v2422 = vmul.f32 %v1734, %v2406
        %v2423 = vpack.c.bf16 %v2408, %v2407
        %v2424 = vpack.c.bf16 %v2410, %v2409
        %v2425 = vpack.c.bf16 %v2412, %v2411
        %v2426 = vpack.c.bf16 %v2414, %v2413
        %v2427 = vpack.c.bf16 %v2416, %v2415
        %v2428 = vpack.c.bf16 %v2418, %v2417
        %v2429 = vpack.c.bf16 %v2420, %v2419
        %v2430 = vpack.c.bf16 %v2422, %v2421
        %v2432 = vperm.slane %v825, 0
        %v2450 = vunpack.c.l.b16 %v809
        %v2451 = vunpack.c.l.b16 %v810
        %v2452 = vunpack.c.l.b16 %v811
        %v2453 = vunpack.c.l.b16 %v812
        %v2454 = vunpack.c.l.b16 %v813
        %v2455 = vunpack.c.l.b16 %v814
        %v2456 = vunpack.c.l.b16 %v815
        %v2457 = vunpack.c.l.b16 %v816
        %v2458 = vunpack.c.l.b16 %v817
        %v2459 = vunpack.c.l.b16 %v818
        %v2460 = vunpack.c.l.b16 %v819
        %v2461 = vunpack.c.l.b16 %v820
        %v2462 = vunpack.c.l.b16 %v821
        %v2463 = vunpack.c.l.b16 %v822
        %v2464 = vunpack.c.l.b16 %v823
        %v2465 = vunpack.c.l.b16 %v824
        %v2466 = vpack.c.b16 %v2451, %v2450
        %v2467 = vpack.c.b16 %v2453, %v2452
        %v2468 = vpack.c.b16 %v2455, %v2454
        %v2469 = vpack.c.b16 %v2457, %v2456
        %v2470 = vpack.c.b16 %v2459, %v2458
        %v2471 = vpack.c.b16 %v2461, %v2460
        %v2472 = vpack.c.b16 %v2463, %v2462
        %v2473 = vpack.c.b16 %v2465, %v2464
        %2482 = vmatpush.bf16.msra.mxu0 %v2473
        %2483 = vmatpush.bf16.msra.mxu0 %v2472
        %2484 = vmatpush.bf16.msra.mxu0 %v2471
        %2485 = vmatpush.bf16.msra.mxu0 %v2470
        %2486 = vmatpush.bf16.msra.mxu0 %v2469
        %2487 = vmatpush.bf16.msra.mxu0 %v2468
        %2488 = vmatpush.bf16.msra.mxu0 %v2467
        %2489 = vmatpush.bf16.msra.mxu0 %v2466
        %2490 = vmatmul.bf16.gmra.mxu0 %v2423
        %v2491 = vpop.f32.mrf.mxu0
        %v2492 = vadd.f32 %v2432, %v2491
        %v2493 = vpop.f32.mrf.mxu0
        %v2494 = vadd.f32 %v2432, %v2493
        %2495 = vmatmul.bf16.gmra.mxu0 %v2424
        %v2496 = vpop.f32.mrf.mxu0
        %v2497 = vadd.f32 %v2432, %v2496
        %v2498 = vpop.f32.mrf.mxu0
        %v2499 = vadd.f32 %v2432, %v2498
        %2500 = vmatmul.bf16.gmra.mxu0 %v2425
        %v2501 = vpop.f32.mrf.mxu0
        %v2502 = vadd.f32 %v2432, %v2501
        %v2503 = vpop.f32.mrf.mxu0
        %v2504 = vadd.f32 %v2432, %v2503
        %2505 = vmatmul.bf16.gmra.mxu0 %v2426
        %v2506 = vpop.f32.mrf.mxu0
        %v2507 = vadd.f32 %v2432, %v2506
        %v2508 = vpop.f32.mrf.mxu0
        %v2509 = vadd.f32 %v2432, %v2508
        %2510 = vmatmul.bf16.gmra.mxu0 %v2427
        %v2511 = vpop.f32.mrf.mxu0
        %v2512 = vadd.f32 %v2432, %v2511
        %v2513 = vpop.f32.mrf.mxu0
        %v2514 = vadd.f32 %v2432, %v2513
        %2515 = vmatmul.bf16.gmra.mxu0 %v2428
        %v2516 = vpop.f32.mrf.mxu0
        %v2517 = vadd.f32 %v2432, %v2516
        %v2518 = vpop.f32.mrf.mxu0
        %v2519 = vadd.f32 %v2432, %v2518
        %2520 = vmatmul.bf16.gmra.mxu0 %v2429
        %v2521 = vpop.f32.mrf.mxu0
        %v2522 = vadd.f32 %v2432, %v2521
        %v2523 = vpop.f32.mrf.mxu0
        %v2524 = vadd.f32 %v2432, %v2523
        %2525 = vmatmul.bf16.gmra.mxu0 %v2430
        %v2526 = vpop.f32.mrf.mxu0
        %v2527 = vadd.f32 %v2432, %v2526
        %v2528 = vpop.f32.mrf.mxu0
        %v2529 = vadd.f32 %v2432, %v2528
        %2530 = vdwg.mxu0
        %2531 = vst [vmem:[%s533] sm:$0xff] %v2492
        %2532 = vst [vmem:[%s533 + $0x8] sm:$0xff] %v2494
        %2533 = vst [vmem:[%s533 + $0x10] sm:$0xff] %v2497
        %2534 = vst [vmem:[%s533 + $0x18] sm:$0xff] %v2499
        %2535 = vst [vmem:[%s533 + $0x20] sm:$0xff] %v2502
        %2536 = vst [vmem:[%s533 + $0x28] sm:$0xff] %v2504
        %2537 = vst [vmem:[%s533 + $0x30] sm:$0xff] %v2507
        %2538 = vst [vmem:[%s533 + $0x38] sm:$0xff] %v2509
        %2539 = vst [vmem:[%s533 + $0x40] sm:$0xff] %v2512
        %2540 = vst [vmem:[%s533 + $0x48] sm:$0xff] %v2514
        %2541 = vst [vmem:[%s533 + $0x50] sm:$0xff] %v2517
        %2542 = vst [vmem:[%s533 + $0x58] sm:$0xff] %v2519
        %2543 = vst [vmem:[%s533 + $0x60] sm:$0xff] %v2522
        %2544 = vst [vmem:[%s533 + $0x68] sm:$0xff] %v2524
        %2545 = vst [vmem:[%s533 + $0x70] sm:$0xff] %v2527
        %2546 = vst [vmem:[%s533 + $0x78] sm:$0xff] %v2529
        %s2547 = sand.u32 %s279, 1
        %s2548 = scalar_lea.sflag [#allocation5], %s2547
        %s2549 = sand.u32 %s279, 1
        %s2550 = smul.addr %s2549, 128
        %s2551 = scalar_lea.vmem [#allocation14], %s2550
        // Predicated region
        $region89: #{tpu_custom_call.1} parent=55 // pred_check
          %p2552 = pneg %p289
        $region90: #{tpu_custom_call.1} parent=55 // pred_check_branch
          %2554 = sbr.rel (%p2552) target = $region92
        $region91: #{tpu_custom_call.1} parent=55 // pred_region
          %s2555 = smul.u32 16, %s36
          %2557 = vsyncadd %s2548, 0
          %s2558 = smul.addr %s35, 32
          %s2559 = sadd.s32 %s2555, %s2558
          %s2560 = smul.addr %s2559, 8
          %s2561 = scalar_lea.hbm %s9, %s2560
          %s2562 = sshll.u32 %s2551, 4
          %s2563 = int_to_ptr.vmem [resolvable:$true] %s2562
          %s2564 = sshll.u32 %s2561, 4
          %s2565 = int_to_ptr.hbm [resolvable:$true] %s2564
          %2570 = dma.vmem_to_hbm [thread:$0]  %s2563, 2048, %s2565, %s2548, 128, 128, 8
        $region92: #{tpu_custom_call.1} parent=55 // pred_fallthru
          _
      $region56: #{tpu_custom_call.1} parent=5 // pred_fallthru
        _
      %p2571 = scmp.le.s32.totalorder 2, %s26
      // Predicated region
      $region93: #{tpu_custom_call.1} parent=5 // pred_check
        %p2572 = pneg %p2571
      $region94: #{tpu_custom_call.1} parent=5 // pred_check_branch
        %2574 = sbr.rel (%p2572) target = $region96
      $region95: #{tpu_custom_call.1} parent=5 // pred_region
        %s2575 = ssub.s32 %s26, 2
        // Predicated region
        $region97: #{tpu_custom_call.1} parent=95 // pred_check
          %p2576 = pneg %p295
        $region98: #{tpu_custom_call.1} parent=95 // pred_check_branch
          %2578 = sbr.rel (%p2576) target = $region100
        $region99: #{tpu_custom_call.1} parent=95 // pred_region
          %s2579 = sand.u32 %s280, 1
          %s2580 = scalar_lea.sflag [#allocation5], %s2579
          %s2581 = sand.u32 %s280, 1
          %s2582 = smul.addr %s2581, 128
          %s2583 = scalar_lea.vmem [#allocation14], %s2582
          %2585 = dma.done %s2580, 2048
        $region100: #{tpu_custom_call.1} parent=95 // pred_fallthru
          _
      $region96: #{tpu_custom_call.1} parent=5 // pred_fallthru
        _
    $region6: #{tpu_custom_call.1} parent=1 // loop_footer
      %s30 = sadd.s32 1, %s26
    $region7: #{tpu_custom_call.1} parent=1 // loop_footer_branch
      %25 = sbr.rel target = $region3
    $region8: #{tpu_custom_call.1} parent=1 // loop_exit
      _
    %2586 = vsyncpa [#allocation4], 1
    %s2587 = scalar_lea.sflag [#allocation4], 1
    %2588 = vsyncpa %s2587, 1
    %2589 = vsyncpa [#allocation7], 1
    %s2590 = scalar_lea.sflag [#allocation7], 1
    %2591 = vsyncpa %s2590, 1
    %2592 = vsyncpa [#allocation10], 1
    %2593 = vsyncpa [#allocation13], 1
    %2594 = vsyncpa [#allocation5], 1
    %s2595 = scalar_lea.sflag [#allocation5], 1
    %2596 = vsyncpa %s2595, 1

</llo_original>
